<compile_context>
chip_gen: v6e
topology: v6e:2x2x1
jax: 0.10.0
libtpu: 0.0.40
codegen_flags: <defaults>
</compile_context>

<pallas_src>
import math

import jax
import jax.numpy as jnp
from jax import lax
from jax.experimental import pallas as pl
from jax.experimental.pallas import tpu as pltpu


# ------------------------------ helpers -------------------------------------

def _round_up(x, m):
    return ((x + m - 1) // m) * m


def _full_spec(shape):
    zeros = (0,) * len(shape)
    return pl.BlockSpec(shape, lambda v: zeros)   # same block every grid step (resident)


# ------------------------------ Pallas kernel --------------------------------

def _make_seq2seq_kernel(t_enc, t_dec, b_pad, unroll_enc, unroll_dec):
    def kernel(xe_ref, ye_ref,
               wih_e_ref, whh_e_ref, be_ref,
               wb_ref, bb_ref,
               wih_d_ref, whh_d_ref, bd_ref,
               wout_ref, bout_ref,
               logits_ref,
               proj_scr, hd_scr):
        f32 = jnp.float32

        # Recurrences run once (first V-tile step); hd_scr persists across grid steps.
        @pl.when(pl.program_id(0) == 0)
        def _run_recurrences():
            # (1) Encoder input projection hoisted: one [Te*B, E] @ [E, H] bf16 GEMM.
            proj_scr[pl.ds(0, t_enc * b_pad), :] = (
                jnp.dot(xe_ref[...], wih_e_ref[...], preferred_element_type=f32)
                + be_ref[...])

            whh_e = whh_e_ref[...]
            h_pad = whh_e.shape[0]

            # (2) Encoder recurrence: only h @ W_hh (f32) stays in the sequential loop;
            #     the hidden state is carried in vregs.
            def enc_step(t, h):
                row = pl.multiple_of(t * b_pad, b_pad)
                pre = proj_scr[pl.ds(row, b_pad), :] + jnp.dot(
                    h, whh_e, preferred_element_type=f32)
                return jnp.tanh(pre)

            h_enc = lax.fori_loop(0, t_enc, enc_step,
                                  jnp.zeros((b_pad, h_pad), f32),
                                  unroll=unroll_enc)

            # (3) Bridge fused: context = tanh(h_enc @ W_b + b_b)  (f32).
            h0 = jnp.tanh(
                jnp.dot(h_enc, wb_ref[...], preferred_element_type=f32) + bb_ref[...])

            # (4) Decoder input projection reuses the same slab (encoder xp is dead).
            proj_scr[pl.ds(0, t_dec * b_pad), :] = (
                jnp.dot(ye_ref[...], wih_d_ref[...], preferred_element_type=f32)
                + bd_ref[...])

            whh_d = whh_d_ref[...]

            def dec_step(t, h):
                row = pl.multiple_of(t * b_pad, b_pad)
                pre = proj_scr[pl.ds(row, b_pad), :] + jnp.dot(
                    h, whh_d, preferred_element_type=f32)
                h_new = jnp.tanh(pre)
                # yp[t] is dead after the read above; stash h_t in its place
                # (f32, 8-row-aligned store), cast to bf16 once after the loop.
                proj_scr[pl.ds(row, b_pad), :] = h_new
                return h_new

            lax.fori_loop(0, t_dec, dec_step, h0, unroll=unroll_dec)

            # Single whole-slab cast into the bf16 stash used by every V-tile GEMM.
            hd_scr[...] = proj_scr[pl.ds(0, t_dec * b_pad), :].astype(hd_scr.dtype)

        # (5) Vocab projection, tiled over V by the grid: [Td*B, H] @ [H, TV] bf16
        #     GEMM per step, lane-dense f32 logits tile written back per step.
        # TODO(synk): if the W_out tile fetch stays exposed (small M = Td*B), bump the
        # wout BlockSpec to pipeline_mode=pl.Buffered(3).
        logits_ref[...] = (
            jnp.dot(hd_scr[...], wout_ref[...], preferred_element_type=f32)
            + bout_ref[...])

    return kernel


# ------------------------------ wrapper ---------------------------------------

def seq2seq_forward(params, input_encoder, input_decoder, *, vocab_tile=512):
    """Mirrors Seq2Seq.forward: returns decoder logits, time-major [T_dec, B, V]."""
    # Embedding lookups (glue JAX).
    # TODO(synk): for large E / long sequences, scalar-prefetch the token ids and
    # gather embedding rows inside the kernel instead of materializing x_emb/y_emb.
    x_emb = jnp.take(params["enc_embed"], input_encoder, axis=0)   # [Te, B, E]
    y_emb = jnp.take(params["dec_embed"], input_decoder, axis=0)   # [Td, B, E]

    t_enc, batch, e_dim = x_emb.shape
    t_dec = y_emb.shape[0]
    h_dim = params["enc_w_hh"].shape[0]
    v_dim = params["dec_w_out"].shape[1]

    # NOTE: callers should pack multiple independent sequences so batch >= 32-128;
    # with tiny batches most MXU rows are padding.
    b_pad = _round_up(batch, 8)      # sublane alignment
    e_pad = _round_up(e_dim, 128)    # lane alignment
    h_pad = _round_up(h_dim, 128)

    # Vocab tiling: a multiple of 256 when tiling (v6e/v7x MXU is 2x256^2);
    # a single full-width tile for small vocabularies.
    v_pad = _round_up(v_dim, 128)
    if v_pad > vocab_tile:
        tv = _round_up(vocab_tile, 256)
        v_pad = _round_up(v_pad, tv)
    else:
        tv = v_pad
    num_v = v_pad // tv

    bf16, f32 = jnp.bfloat16, jnp.float32

    def pad2(a, rows, cols, dtype):
        a = jnp.pad(a, ((0, rows - a.shape[0]), (0, cols - a.shape[1])))
        return a.astype(dtype)

    # bf16 on GEMM operands (MXU-native, halves HBM bytes); recurrent/bridge weights
    # and all biases stay f32.
    xe = jnp.pad(x_emb, ((0, 0), (0, b_pad - batch), (0, e_pad - e_dim)))
    ye = jnp.pad(y_emb, ((0, 0), (0, b_pad - batch), (0, e_pad - e_dim)))
    xe = xe.reshape(t_enc * b_pad, e_pad).astype(bf16)
    ye = ye.reshape(t_dec * b_pad, e_pad).astype(bf16)

    wih_e = pad2(params["enc_w_ih"], e_pad, h_pad, bf16)
    whh_e = pad2(params["enc_w_hh"], h_pad, h_pad, f32)
    be    = pad2(params["enc_b"], 1, h_pad, f32)
    wb    = pad2(params["bridge_w"], h_pad, h_pad, f32)
    bb    = pad2(params["bridge_b"], 1, h_pad, f32)
    wih_d = pad2(params["dec_w_ih"], e_pad, h_pad, bf16)
    whh_d = pad2(params["dec_w_hh"], h_pad, h_pad, f32)
    bd    = pad2(params["dec_b"], 1, h_pad, f32)
    wout  = pad2(params["dec_w_out"], h_pad, v_pad, bf16)
    bout  = pad2(params["dec_b_out"], 1, v_pad, f32)

    operands = (xe, ye, wih_e, whh_e, be, wb, bb, wih_d, whh_d, bd, wout, bout)

    proj_rows = max(t_enc, t_dec) * b_pad
    hd_rows = t_dec * b_pad

    # Explicit VMEM budget (scoped default is 16/32 MiB; v7x physical is 64 MiB).
    def nbytes(shape, dtype):
        return math.prod(shape) * jnp.dtype(dtype).itemsize

    resident = sum(nbytes(op.shape, op.dtype) for op in operands[:-2])
    tiled = 2 * (nbytes((h_pad, tv), bf16) + nbytes((1, tv), f32)
                 + nbytes((hd_rows, tv), f32))
    scratch = nbytes((proj_rows, h_pad), f32) + nbytes((hd_rows, h_pad), bf16)
    vmem_budget = int(1.5 * (2 * resident + tiled + scratch))
    vmem_budget = min(max(vmem_budget, 16 * 1024 * 1024), 64 * 1024 * 1024)

    # Full unroll only for short sequences; partial unroll keeps LLO visibility
    # without blowing up instruction memory / vreg pressure at realistic T.
    unroll_enc = max(1, min(t_enc, 8))
    unroll_dec = max(1, min(t_dec, 8))

    in_specs = [_full_spec(op.shape) for op in operands[:-2]]
    in_specs += [
        pl.BlockSpec((h_pad, tv), lambda v: (0, v)),   # W_out tile
        pl.BlockSpec((1, tv), lambda v: (0, v)),       # b_out tile
    ]

    # TODO(synk): on v7x, split into (recurrence kernel -> hd in HBM) + (standard tiled
    # matmul with parallel M/N axes) to shard the vocab GEMM across both TensorCores.
    logits_flat = pl.pallas_call(
        _make_seq2seq_kernel(t_enc, t_dec, b_pad, unroll_enc, unroll_dec),
        grid=(num_v,),
        out_shape=jax.ShapeDtypeStruct((hd_rows, v_pad), jnp.float32),
        in_specs=in_specs,
        out_specs=pl.BlockSpec((hd_rows, tv), lambda v: (0, v)),
        scratch_shapes=[
            pltpu.VMEM((proj_rows, h_pad), jnp.float32),   # shared xp / yp / hd slab
            pltpu.VMEM((hd_rows, h_pad), jnp.bfloat16),    # decoder hidden stash (bf16)
        ],
        compiler_params=pltpu.CompilerParams(
            dimension_semantics=("arbitrary",),   # recurrence state carried across V-tiles
            vmem_limit_bytes=vmem_budget,
        ),
    )(*operands)

    logits = logits_flat.reshape(t_dec, b_pad, v_pad)[:, :batch, :v_dim]
    return logits


# ------------------------------ reference -------------------------------------

def seq2seq_reference(params, input_encoder, input_decoder):
    x_emb = jnp.take(params["enc_embed"], input_encoder, axis=0)
    y_emb = jnp.take(params["dec_embed"], input_decoder, axis=0)
    batch = x_emb.shape[1]
    h_dim = params["enc_w_hh"].shape[0]

    def enc_step(h, x_t):
        h = jnp.tanh(x_t @ params["enc_w_ih"] + h @ params["enc_w_hh"] + params["enc_b"])
        return h, None

    h_enc, _ = lax.scan(enc_step, jnp.zeros((batch, h_dim), jnp.float32), x_emb)
    ctx = jnp.tanh(h_enc @ params["bridge_w"] + params["bridge_b"])

    def dec_step(h, y_t):
        h = jnp.tanh(y_t @ params["dec_w_ih"] + h @ params["dec_w_hh"] + params["dec_b"])
        logits = h @ params["dec_w_out"] + params["dec_b_out"]
        return h, logits

    _, logits = lax.scan(dec_step, ctx, y_emb)
    return logits


# --------------------------------- main ----------------------------------------

if __name__ == "__main__":
    B, T_ENC, T_DEC = 2, 8, 8
    E, H, V = 32, 32, 16

    key = jax.random.PRNGKey(0)
    ks = jax.random.split(key, 12)
    s = 0.1
    params = {
        "enc_embed": s * jax.random.normal(ks[0], (V, E), jnp.float32),
        "enc_w_ih":  s * jax.random.normal(ks[1], (E, H), jnp.float32),
        "enc_w_hh":  s * jax.random.normal(ks[2], (H, H), jnp.float32),
        "enc_b":     s * jax.random.normal(ks[3], (1, H), jnp.float32),
        "bridge_w":  s * jax.random.normal(ks[4], (H, H), jnp.float32),
        "bridge_b":  s * jax.random.normal(ks[5], (1, H), jnp.float32),
        "dec_embed": s * jax.random.normal(ks[6], (V, E), jnp.float32),
        "dec_w_ih":  s * jax.random.normal(ks[7], (E, H), jnp.float32),
        "dec_w_hh":  s * jax.random.normal(ks[8], (H, H), jnp.float32),
        "dec_b":     s * jax.random.normal(ks[9], (1, H), jnp.float32),
        "dec_w_out": s * jax.random.normal(ks[10], (H, V), jnp.float32),
        "dec_b_out": s * jax.random.normal(ks[11], (1, V), jnp.float32),
    }

    input_encoder = jax.random.randint(jax.random.PRNGKey(1), (T_ENC, B), 0, V, jnp.int32)
    input_decoder = jax.random.randint(jax.random.PRNGKey(2), (T_DEC, B), 0, V, jnp.int32)

    out = jax.block_until_ready(seq2seq_forward(params, input_encoder, input_decoder))
    ref = jax.block_until_ready(seq2seq_reference(params, input_encoder, input_decoder))

    assert out.shape == (T_DEC, B, V), out.shape
    # Tolerance loosened vs the pure-f32 version: input/vocab GEMMs run in bf16
    # (f32 accumulation); the recurrent path stays f32.
    err = float(jnp.max(jnp.abs(out - ref)))
    assert jnp.allclose(out, ref, atol=1e-2, rtol=1e-2), err
    print("KERNEL_OK")
</pallas_src>

<mosaic_0001>
module attributes {stable_mosaic.version = 11 : i64} {
  func.func @kernel(%arg0: i32, %arg1: memref<64x128xbf16, #tpu.memory_space<vmem>>, %arg2: memref<64x128xbf16, #tpu.memory_space<vmem>>, %arg3: memref<128x128xbf16, #tpu.memory_space<vmem>>, %arg4: memref<128x128xf32, #tpu.memory_space<vmem>>, %arg5: memref<1x128xf32, #tpu.memory_space<vmem>>, %arg6: memref<128x128xf32, #tpu.memory_space<vmem>>, %arg7: memref<1x128xf32, #tpu.memory_space<vmem>>, %arg8: memref<128x128xbf16, #tpu.memory_space<vmem>>, %arg9: memref<128x128xf32, #tpu.memory_space<vmem>>, %arg10: memref<1x128xf32, #tpu.memory_space<vmem>>, %arg11: memref<128x128xbf16, #tpu.memory_space<vmem>>, %arg12: memref<1x128xf32, #tpu.memory_space<vmem>>, %arg13: memref<64x128xf32, #tpu.memory_space<vmem>>, %arg14: memref<64x128xf32, #tpu.memory_space<vmem>>, %arg15: memref<64x128xbf16, #tpu.memory_space<vmem>>) attributes {dimension_semantics = [#tpu.dimension_semantics<arbitrary>], iteration_bounds = array<i64: 1>, scalar_prefetch = 0 : i64, scratch_operands = 2 : i64, tpu.core_type = #tpu.core_type<tc>, window_params = [{pipeline_mode = #tpu.pipeline_mode<synchronous>, transform_indices = @transform_0, window_bounds = array<i64: 64, 128>}, {pipeline_mode = #tpu.pipeline_mode<synchronous>, transform_indices = @transform_1, window_bounds = array<i64: 64, 128>}, {pipeline_mode = #tpu.pipeline_mode<synchronous>, transform_indices = @transform_2, window_bounds = array<i64: 128, 128>}, {pipeline_mode = #tpu.pipeline_mode<synchronous>, transform_indices = @transform_3, window_bounds = array<i64: 128, 128>}, {pipeline_mode = #tpu.pipeline_mode<synchronous>, transform_indices = @transform_4, window_bounds = array<i64: 1, 128>}, {pipeline_mode = #tpu.pipeline_mode<synchronous>, transform_indices = @transform_5, window_bounds = array<i64: 128, 128>}, {pipeline_mode = #tpu.pipeline_mode<synchronous>, transform_indices = @transform_6, window_bounds = array<i64: 1, 128>}, {pipeline_mode = #tpu.pipeline_mode<synchronous>, transform_indices = @transform_7, window_bounds = array<i64: 128, 128>}, {pipeline_mode = #tpu.pipeline_mode<synchronous>, transform_indices = @transform_8, window_bounds = array<i64: 128, 128>}, {pipeline_mode = #tpu.pipeline_mode<synchronous>, transform_indices = @transform_9, window_bounds = array<i64: 1, 128>}, {transform_indices = @transform_10, window_bounds = array<i64: 128, 128>}, {transform_indices = @transform_11, window_bounds = array<i64: 1, 128>}, {transform_indices = @transform_12, window_bounds = array<i64: 64, 128>}]} {
    %c0_i32 = arith.constant 0 : i32
    %0 = arith.cmpi eq, %arg0, %c0_i32 : i32
    %1 = arith.extui %0 : i1 to i32
    %c0_i32_0 = arith.constant 0 : i32
    %2 = arith.cmpi ne, %1, %c0_i32_0 : i32
    scf.if %2 {
      %c0_8 = arith.constant 0 : index
      %c0_9 = arith.constant 0 : index
      %10 = vector.load %arg1[%c0_8, %c0_9] : memref<64x128xbf16, #tpu.memory_space<vmem>>, vector<64x128xbf16>
      %c0_10 = arith.constant 0 : index
      %c0_11 = arith.constant 0 : index
      %11 = vector.load %arg3[%c0_10, %c0_11] : memref<128x128xbf16, #tpu.memory_space<vmem>>, vector<128x128xbf16>
      %cst_12 = arith.constant dense<0.000000e+00> : vector<64x128xf32>
      %12 = tpu.matmul %10, %11, %cst_12 {dimension_numbers = #tpu.dot_dimension_numbers<[1], [0], [0], [1], [0, 0, 1, 1], [], []>} : vector<64x128xbf16>, vector<128x128xbf16>, vector<64x128xf32> -> vector<64x128xf32>
      %c0_13 = arith.constant 0 : index
      %c0_14 = arith.constant 0 : index
      %13 = vector.load %arg5[%c0_13, %c0_14] : memref<1x128xf32, #tpu.memory_space<vmem>>, vector<1x128xf32>
      %14 = vector.broadcast %13 : vector<1x128xf32> to vector<64x128xf32>
      %15 = arith.addf %12, %14 : vector<64x128xf32>
      %c0_15 = arith.constant 0 : index
      %c0_16 = arith.constant 0 : index
      %16 = vector.load %arg14[%c0_15, %c0_16] : memref<64x128xf32, #tpu.memory_space<vmem>>, vector<64x128xf32>
      tpu.vector_store %arg14[%c0_15, %c0_16], %15 {strides = array<i32>} : memref<64x128xf32, #tpu.memory_space<vmem>>, vector<64x128xf32>,
      %c0_17 = arith.constant 0 : index
      %c0_18 = arith.constant 0 : index
      %17 = vector.load %arg4[%c0_17, %c0_18] : memref<128x128xf32, #tpu.memory_space<vmem>>, vector<128x128xf32>
      %cst_19 = arith.constant 0.000000e+00 : f32
      %18 = vector.broadcast %cst_19 : f32 to vector<8x128xf32>
      %c0_i32_20 = arith.constant 0 : i32
      %c8_i32 = arith.constant 8 : i32
      %19 = arith.muli %c0_i32_20, %c8_i32 : i32
      %20 = tpu.assume_multiple %19, 8 : i32
      %21 = arith.index_cast %20 : i32 to index
      %c0_21 = arith.constant 0 : index
      %22 = vector.load %arg14[%21, %c0_21] : memref<64x128xf32, #tpu.memory_space<vmem>>, vector<8x128xf32>
      %cst_22 = arith.constant dense<0.000000e+00> : vector<8x128xf32>
      %23 = tpu.matmul %18, %17, %cst_22 {dimension_numbers = #tpu.dot_dimension_numbers<[1], [0], [0], [1], [0, 0, 1, 1], [], []>} : vector<8x128xf32>, vector<128x128xf32>, vector<8x128xf32> -> vector<8x128xf32>
      %24 = arith.addf %22, %23 : vector<8x128xf32>
      %25 = math.tanh %24 : vector<8x128xf32>
      %c1_i32 = arith.constant 1 : i32
      %c8_i32_23 = arith.constant 8 : i32
      %26 = arith.muli %c1_i32, %c8_i32_23 : i32
      %27 = tpu.assume_multiple %26, 8 : i32
      %28 = arith.index_cast %27 : i32 to index
      %c0_24 = arith.constant 0 : index
      %29 = vector.load %arg14[%28, %c0_24] : memref<64x128xf32, #tpu.memory_space<vmem>>, vector<8x128xf32>
      %cst_25 = arith.constant dense<0.000000e+00> : vector<8x128xf32>
      %30 = tpu.matmul %25, %17, %cst_25 {dimension_numbers = #tpu.dot_dimension_numbers<[1], [0], [0], [1], [0, 0, 1, 1], [], []>} : vector<8x128xf32>, vector<128x128xf32>, vector<8x128xf32> -> vector<8x128xf32>
      %31 = arith.addf %29, %30 : vector<8x128xf32>
      %32 = math.tanh %31 : vector<8x128xf32>
      %c2_i32 = arith.constant 2 : i32
      %c8_i32_26 = arith.constant 8 : i32
      %33 = arith.muli %c2_i32, %c8_i32_26 : i32
      %34 = tpu.assume_multiple %33, 8 : i32
      %35 = arith.index_cast %34 : i32 to index
      %c0_27 = arith.constant 0 : index
      %36 = vector.load %arg14[%35, %c0_27] : memref<64x128xf32, #tpu.memory_space<vmem>>, vector<8x128xf32>
      %cst_28 = arith.constant dense<0.000000e+00> : vector<8x128xf32>
      %37 = tpu.matmul %32, %17, %cst_28 {dimension_numbers = #tpu.dot_dimension_numbers<[1], [0], [0], [1], [0, 0, 1, 1], [], []>} : vector<8x128xf32>, vector<128x128xf32>, vector<8x128xf32> -> vector<8x128xf32>
      %38 = arith.addf %36, %37 : vector<8x128xf32>
      %39 = math.tanh %38 : vector<8x128xf32>
      %c3_i32 = arith.constant 3 : i32
      %c8_i32_29 = arith.constant 8 : i32
      %40 = arith.muli %c3_i32, %c8_i32_29 : i32
      %41 = tpu.assume_multiple %40, 8 : i32
      %42 = arith.index_cast %41 : i32 to index
      %c0_30 = arith.constant 0 : index
      %43 = vector.load %arg14[%42, %c0_30] : memref<64x128xf32, #tpu.memory_space<vmem>>, vector<8x128xf32>
      %cst_31 = arith.constant dense<0.000000e+00> : vector<8x128xf32>
      %44 = tpu.matmul %39, %17, %cst_31 {dimension_numbers = #tpu.dot_dimension_numbers<[1], [0], [0], [1], [0, 0, 1, 1], [], []>} : vector<8x128xf32>, vector<128x128xf32>, vector<8x128xf32> -> vector<8x128xf32>
      %45 = arith.addf %43, %44 : vector<8x128xf32>
      %46 = math.tanh %45 : vector<8x128xf32>
      %c4_i32 = arith.constant 4 : i32
      %c8_i32_32 = arith.constant 8 : i32
      %47 = arith.muli %c4_i32, %c8_i32_32 : i32
      %48 = tpu.assume_multiple %47, 8 : i32
      %49 = arith.index_cast %48 : i32 to index
      %c0_33 = arith.constant 0 : index
      %50 = vector.load %arg14[%49, %c0_33] : memref<64x128xf32, #tpu.memory_space<vmem>>, vector<8x128xf32>
      %cst_34 = arith.constant dense<0.000000e+00> : vector<8x128xf32>
      %51 = tpu.matmul %46, %17, %cst_34 {dimension_numbers = #tpu.dot_dimension_numbers<[1], [0], [0], [1], [0, 0, 1, 1], [], []>} : vector<8x128xf32>, vector<128x128xf32>, vector<8x128xf32> -> vector<8x128xf32>
      %52 = arith.addf %50, %51 : vector<8x128xf32>
      %53 = math.tanh %52 : vector<8x128xf32>
      %c5_i32 = arith.constant 5 : i32
      %c8_i32_35 = arith.constant 8 : i32
      %54 = arith.muli %c5_i32, %c8_i32_35 : i32
      %55 = tpu.assume_multiple %54, 8 : i32
      %56 = arith.index_cast %55 : i32 to index
      %c0_36 = arith.constant 0 : index
      %57 = vector.load %arg14[%56, %c0_36] : memref<64x128xf32, #tpu.memory_space<vmem>>, vector<8x128xf32>
      %cst_37 = arith.constant dense<0.000000e+00> : vector<8x128xf32>
      %58 = tpu.matmul %53, %17, %cst_37 {dimension_numbers = #tpu.dot_dimension_numbers<[1], [0], [0], [1], [0, 0, 1, 1], [], []>} : vector<8x128xf32>, vector<128x128xf32>, vector<8x128xf32> -> vector<8x128xf32>
      %59 = arith.addf %57, %58 : vector<8x128xf32>
      %60 = math.tanh %59 : vector<8x128xf32>
      %c6_i32 = arith.constant 6 : i32
      %c8_i32_38 = arith.constant 8 : i32
      %61 = arith.muli %c6_i32, %c8_i32_38 : i32
      %62 = tpu.assume_multiple %61, 8 : i32
      %63 = arith.index_cast %62 : i32 to index
      %c0_39 = arith.constant 0 : index
      %64 = vector.load %arg14[%63, %c0_39] : memref<64x128xf32, #tpu.memory_space<vmem>>, vector<8x128xf32>
      %cst_40 = arith.constant dense<0.000000e+00> : vector<8x128xf32>
      %65 = tpu.matmul %60, %17, %cst_40 {dimension_numbers = #tpu.dot_dimension_numbers<[1], [0], [0], [1], [0, 0, 1, 1], [], []>} : vector<8x128xf32>, vector<128x128xf32>, vector<8x128xf32> -> vector<8x128xf32>
      %66 = arith.addf %64, %65 : vector<8x128xf32>
      %67 = math.tanh %66 : vector<8x128xf32>
      %c7_i32 = arith.constant 7 : i32
      %c8_i32_41 = arith.constant 8 : i32
      %68 = arith.muli %c7_i32, %c8_i32_41 : i32
      %69 = tpu.assume_multiple %68, 8 : i32
      %70 = arith.index_cast %69 : i32 to index
      %c0_42 = arith.constant 0 : index
      %71 = vector.load %arg14[%70, %c0_42] : memref<64x128xf32, #tpu.memory_space<vmem>>, vector<8x128xf32>
      %cst_43 = arith.constant dense<0.000000e+00> : vector<8x128xf32>
      %72 = tpu.matmul %67, %17, %cst_43 {dimension_numbers = #tpu.dot_dimension_numbers<[1], [0], [0], [1], [0, 0, 1, 1], [], []>} : vector<8x128xf32>, vector<128x128xf32>, vector<8x128xf32> -> vector<8x128xf32>
      %73 = arith.addf %71, %72 : vector<8x128xf32>
      %74 = math.tanh %73 : vector<8x128xf32>
      %c8_i32_44 = arith.constant 8 : i32
      %c0_45 = arith.constant 0 : index
      %c0_46 = arith.constant 0 : index
      %75 = vector.load %arg6[%c0_45, %c0_46] : memref<128x128xf32, #tpu.memory_space<vmem>>, vector<128x128xf32>
      %cst_47 = arith.constant dense<0.000000e+00> : vector<8x128xf32>
      %76 = tpu.matmul %74, %75, %cst_47 {dimension_numbers = #tpu.dot_dimension_numbers<[1], [0], [0], [1], [0, 0, 1, 1], [], []>} : vector<8x128xf32>, vector<128x128xf32>, vector<8x128xf32> -> vector<8x128xf32>
      %c0_48 = arith.constant 0 : index
      %c0_49 = arith.constant 0 : index
      %77 = vector.load %arg7[%c0_48, %c0_49] : memref<1x128xf32, #tpu.memory_space<vmem>>, vector<1x128xf32>
      %78 = vector.broadcast %77 : vector<1x128xf32> to vector<8x128xf32>
      %79 = arith.addf %76, %78 : vector<8x128xf32>
      %80 = math.tanh %79 : vector<8x128xf32>
      %c0_50 = arith.constant 0 : index
      %c0_51 = arith.constant 0 : index
      %81 = vector.load %arg2[%c0_50, %c0_51] : memref<64x128xbf16, #tpu.memory_space<vmem>>, vector<64x128xbf16>
      %c0_52 = arith.constant 0 : index
      %c0_53 = arith.constant 0 : index
      %82 = vector.load %arg8[%c0_52, %c0_53] : memref<128x128xbf16, #tpu.memory_space<vmem>>, vector<128x128xbf16>
      %cst_54 = arith.constant dense<0.000000e+00> : vector<64x128xf32>
      %83 = tpu.matmul %81, %82, %cst_54 {dimension_numbers = #tpu.dot_dimension_numbers<[1], [0], [0], [1], [0, 0, 1, 1], [], []>} : vector<64x128xbf16>, vector<128x128xbf16>, vector<64x128xf32> -> vector<64x128xf32>
      %c0_55 = arith.constant 0 : index
      %c0_56 = arith.constant 0 : index
      %84 = vector.load %arg10[%c0_55, %c0_56] : memref<1x128xf32, #tpu.memory_space<vmem>>, vector<1x128xf32>
      %85 = vector.broadcast %84 : vector<1x128xf32> to vector<64x128xf32>
      %86 = arith.addf %83, %85 : vector<64x128xf32>
      %c0_57 = arith.constant 0 : index
      %c0_58 = arith.constant 0 : index
      %87 = vector.load %arg14[%c0_57, %c0_58] : memref<64x128xf32, #tpu.memory_space<vmem>>, vector<64x128xf32>
      tpu.vector_store %arg14[%c0_57, %c0_58], %86 {strides = array<i32>} : memref<64x128xf32, #tpu.memory_space<vmem>>, vector<64x128xf32>,
      %c0_59 = arith.constant 0 : index
      %c0_60 = arith.constant 0 : index
      %88 = vector.load %arg9[%c0_59, %c0_60] : memref<128x128xf32, #tpu.memory_space<vmem>>, vector<128x128xf32>
      %c0_i32_61 = arith.constant 0 : i32
      %c8_i32_62 = arith.constant 8 : i32
      %89 = arith.muli %c0_i32_61, %c8_i32_62 : i32
      %90 = tpu.assume_multiple %89, 8 : i32
      %91 = arith.index_cast %90 : i32 to index
      %c0_63 = arith.constant 0 : index
      %92 = vector.load %arg14[%91, %c0_63] : memref<64x128xf32, #tpu.memory_space<vmem>>, vector<8x128xf32>
      %cst_64 = arith.constant dense<0.000000e+00> : vector<8x128xf32>
      %93 = tpu.matmul %80, %88, %cst_64 {dimension_numbers = #tpu.dot_dimension_numbers<[1], [0], [0], [1], [0, 0, 1, 1], [], []>} : vector<8x128xf32>, vector<128x128xf32>, vector<8x128xf32> -> vector<8x128xf32>
      %94 = arith.addf %92, %93 : vector<8x128xf32>
      %95 = math.tanh %94 : vector<8x128xf32>
      %96 = arith.index_cast %90 : i32 to index
      %c0_65 = arith.constant 0 : index
      %97 = vector.load %arg14[%96, %c0_65] : memref<64x128xf32, #tpu.memory_space<vmem>>, vector<8x128xf32>
      tpu.vector_store %arg14[%96, %c0_65], %95 {strides = array<i32>} : memref<64x128xf32, #tpu.memory_space<vmem>>, vector<8x128xf32>,
      %c1_i32_66 = arith.constant 1 : i32
      %c8_i32_67 = arith.constant 8 : i32
      %98 = arith.muli %c1_i32_66, %c8_i32_67 : i32
      %99 = tpu.assume_multiple %98, 8 : i32
      %100 = arith.index_cast %99 : i32 to index
      %c0_68 = arith.constant 0 : index
      %101 = vector.load %arg14[%100, %c0_68] : memref<64x128xf32, #tpu.memory_space<vmem>>, vector<8x128xf32>
      %cst_69 = arith.constant dense<0.000000e+00> : vector<8x128xf32>
      %102 = tpu.matmul %95, %88, %cst_69 {dimension_numbers = #tpu.dot_dimension_numbers<[1], [0], [0], [1], [0, 0, 1, 1], [], []>} : vector<8x128xf32>, vector<128x128xf32>, vector<8x128xf32> -> vector<8x128xf32>
      %103 = arith.addf %101, %102 : vector<8x128xf32>
      %104 = math.tanh %103 : vector<8x128xf32>
      %105 = arith.index_cast %99 : i32 to index
      %c0_70 = arith.constant 0 : index
      %106 = vector.load %arg14[%105, %c0_70] : memref<64x128xf32, #tpu.memory_space<vmem>>, vector<8x128xf32>
      tpu.vector_store %arg14[%105, %c0_70], %104 {strides = array<i32>} : memref<64x128xf32, #tpu.memory_space<vmem>>, vector<8x128xf32>,
      %c2_i32_71 = arith.constant 2 : i32
      %c8_i32_72 = arith.constant 8 : i32
      %107 = arith.muli %c2_i32_71, %c8_i32_72 : i32
      %108 = tpu.assume_multiple %107, 8 : i32
      %109 = arith.index_cast %108 : i32 to index
      %c0_73 = arith.constant 0 : index
      %110 = vector.load %arg14[%109, %c0_73] : memref<64x128xf32, #tpu.memory_space<vmem>>, vector<8x128xf32>
      %cst_74 = arith.constant dense<0.000000e+00> : vector<8x128xf32>
      %111 = tpu.matmul %104, %88, %cst_74 {dimension_numbers = #tpu.dot_dimension_numbers<[1], [0], [0], [1], [0, 0, 1, 1], [], []>} : vector<8x128xf32>, vector<128x128xf32>, vector<8x128xf32> -> vector<8x128xf32>
      %112 = arith.addf %110, %111 : vector<8x128xf32>
      %113 = math.tanh %112 : vector<8x128xf32>
      %114 = arith.index_cast %108 : i32 to index
      %c0_75 = arith.constant 0 : index
      %115 = vector.load %arg14[%114, %c0_75] : memref<64x128xf32, #tpu.memory_space<vmem>>, vector<8x128xf32>
      tpu.vector_store %arg14[%114, %c0_75], %113 {strides = array<i32>} : memref<64x128xf32, #tpu.memory_space<vmem>>, vector<8x128xf32>,
      %c3_i32_76 = arith.constant 3 : i32
      %c8_i32_77 = arith.constant 8 : i32
      %116 = arith.muli %c3_i32_76, %c8_i32_77 : i32
      %117 = tpu.assume_multiple %116, 8 : i32
      %118 = arith.index_cast %117 : i32 to index
      %c0_78 = arith.constant 0 : index
      %119 = vector.load %arg14[%118, %c0_78] : memref<64x128xf32, #tpu.memory_space<vmem>>, vector<8x128xf32>
      %cst_79 = arith.constant dense<0.000000e+00> : vector<8x128xf32>
      %120 = tpu.matmul %113, %88, %cst_79 {dimension_numbers = #tpu.dot_dimension_numbers<[1], [0], [0], [1], [0, 0, 1, 1], [], []>} : vector<8x128xf32>, vector<128x128xf32>, vector<8x128xf32> -> vector<8x128xf32>
      %121 = arith.addf %119, %120 : vector<8x128xf32>
      %122 = math.tanh %121 : vector<8x128xf32>
      %123 = arith.index_cast %117 : i32 to index
      %c0_80 = arith.constant 0 : index
      %124 = vector.load %arg14[%123, %c0_80] : memref<64x128xf32, #tpu.memory_space<vmem>>, vector<8x128xf32>
      tpu.vector_store %arg14[%123, %c0_80], %122 {strides = array<i32>} : memref<64x128xf32, #tpu.memory_space<vmem>>, vector<8x128xf32>,
      %c4_i32_81 = arith.constant 4 : i32
      %c8_i32_82 = arith.constant 8 : i32
      %125 = arith.muli %c4_i32_81, %c8_i32_82 : i32
      %126 = tpu.assume_multiple %125, 8 : i32
      %127 = arith.index_cast %126 : i32 to index
      %c0_83 = arith.constant 0 : index
      %128 = vector.load %arg14[%127, %c0_83] : memref<64x128xf32, #tpu.memory_space<vmem>>, vector<8x128xf32>
      %cst_84 = arith.constant dense<0.000000e+00> : vector<8x128xf32>
      %129 = tpu.matmul %122, %88, %cst_84 {dimension_numbers = #tpu.dot_dimension_numbers<[1], [0], [0], [1], [0, 0, 1, 1], [], []>} : vector<8x128xf32>, vector<128x128xf32>, vector<8x128xf32> -> vector<8x128xf32>
      %130 = arith.addf %128, %129 : vector<8x128xf32>
      %131 = math.tanh %130 : vector<8x128xf32>
      %132 = arith.index_cast %126 : i32 to index
      %c0_85 = arith.constant 0 : index
      %133 = vector.load %arg14[%132, %c0_85] : memref<64x128xf32, #tpu.memory_space<vmem>>, vector<8x128xf32>
      tpu.vector_store %arg14[%132, %c0_85], %131 {strides = array<i32>} : memref<64x128xf32, #tpu.memory_space<vmem>>, vector<8x128xf32>,
      %c5_i32_86 = arith.constant 5 : i32
      %c8_i32_87 = arith.constant 8 : i32
      %134 = arith.muli %c5_i32_86, %c8_i32_87 : i32
      %135 = tpu.assume_multiple %134, 8 : i32
      %136 = arith.index_cast %135 : i32 to index
      %c0_88 = arith.constant 0 : index
      %137 = vector.load %arg14[%136, %c0_88] : memref<64x128xf32, #tpu.memory_space<vmem>>, vector<8x128xf32>
      %cst_89 = arith.constant dense<0.000000e+00> : vector<8x128xf32>
      %138 = tpu.matmul %131, %88, %cst_89 {dimension_numbers = #tpu.dot_dimension_numbers<[1], [0], [0], [1], [0, 0, 1, 1], [], []>} : vector<8x128xf32>, vector<128x128xf32>, vector<8x128xf32> -> vector<8x128xf32>
      %139 = arith.addf %137, %138 : vector<8x128xf32>
      %140 = math.tanh %139 : vector<8x128xf32>
      %141 = arith.index_cast %135 : i32 to index
      %c0_90 = arith.constant 0 : index
      %142 = vector.load %arg14[%141, %c0_90] : memref<64x128xf32, #tpu.memory_space<vmem>>, vector<8x128xf32>
      tpu.vector_store %arg14[%141, %c0_90], %140 {strides = array<i32>} : memref<64x128xf32, #tpu.memory_space<vmem>>, vector<8x128xf32>,
      %c6_i32_91 = arith.constant 6 : i32
      %c8_i32_92 = arith.constant 8 : i32
      %143 = arith.muli %c6_i32_91, %c8_i32_92 : i32
      %144 = tpu.assume_multiple %143, 8 : i32
      %145 = arith.index_cast %144 : i32 to index
      %c0_93 = arith.constant 0 : index
      %146 = vector.load %arg14[%145, %c0_93] : memref<64x128xf32, #tpu.memory_space<vmem>>, vector<8x128xf32>
      %cst_94 = arith.constant dense<0.000000e+00> : vector<8x128xf32>
      %147 = tpu.matmul %140, %88, %cst_94 {dimension_numbers = #tpu.dot_dimension_numbers<[1], [0], [0], [1], [0, 0, 1, 1], [], []>} : vector<8x128xf32>, vector<128x128xf32>, vector<8x128xf32> -> vector<8x128xf32>
      %148 = arith.addf %146, %147 : vector<8x128xf32>
      %149 = math.tanh %148 : vector<8x128xf32>
      %150 = arith.index_cast %144 : i32 to index
      %c0_95 = arith.constant 0 : index
      %151 = vector.load %arg14[%150, %c0_95] : memref<64x128xf32, #tpu.memory_space<vmem>>, vector<8x128xf32>
      tpu.vector_store %arg14[%150, %c0_95], %149 {strides = array<i32>} : memref<64x128xf32, #tpu.memory_space<vmem>>, vector<8x128xf32>,
      %c7_i32_96 = arith.constant 7 : i32
      %c8_i32_97 = arith.constant 8 : i32
      %152 = arith.muli %c7_i32_96, %c8_i32_97 : i32
      %153 = tpu.assume_multiple %152, 8 : i32
      %154 = arith.index_cast %153 : i32 to index
      %c0_98 = arith.constant 0 : index
      %155 = vector.load %arg14[%154, %c0_98] : memref<64x128xf32, #tpu.memory_space<vmem>>, vector<8x128xf32>
      %cst_99 = arith.constant dense<0.000000e+00> : vector<8x128xf32>
      %156 = tpu.matmul %149, %88, %cst_99 {dimension_numbers = #tpu.dot_dimension_numbers<[1], [0], [0], [1], [0, 0, 1, 1], [], []>} : vector<8x128xf32>, vector<128x128xf32>, vector<8x128xf32> -> vector<8x128xf32>
      %157 = arith.addf %155, %156 : vector<8x128xf32>
      %158 = math.tanh %157 : vector<8x128xf32>
      %159 = arith.index_cast %153 : i32 to index
      %c0_100 = arith.constant 0 : index
      %160 = vector.load %arg14[%159, %c0_100] : memref<64x128xf32, #tpu.memory_space<vmem>>, vector<8x128xf32>
      tpu.vector_store %arg14[%159, %c0_100], %158 {strides = array<i32>} : memref<64x128xf32, #tpu.memory_space<vmem>>, vector<8x128xf32>,
      %c8_i32_101 = arith.constant 8 : i32
      %c0_102 = arith.constant 0 : index
      %c0_103 = arith.constant 0 : index
      %161 = vector.load %arg14[%c0_102, %c0_103] : memref<64x128xf32, #tpu.memory_space<vmem>>, vector<64x128xf32>
      %162 = arith.truncf %161 : vector<64x128xf32> to vector<64x128xbf16>
      %c0_104 = arith.constant 0 : index
      %c0_105 = arith.constant 0 : index
      %163 = vector.load %arg15[%c0_104, %c0_105] : memref<64x128xbf16, #tpu.memory_space<vmem>>, vector<64x128xbf16>
      tpu.vector_store %arg15[%c0_104, %c0_105], %162 {strides = array<i32>} : memref<64x128xbf16, #tpu.memory_space<vmem>>, vector<64x128xbf16>,
    } else {
    }
    %c0 = arith.constant 0 : index
    %c0_1 = arith.constant 0 : index
    %3 = vector.load %arg15[%c0, %c0_1] : memref<64x128xbf16, #tpu.memory_space<vmem>>, vector<64x128xbf16>
    %c0_2 = arith.constant 0 : index
    %c0_3 = arith.constant 0 : index
    %4 = vector.load %arg11[%c0_2, %c0_3] : memref<128x128xbf16, #tpu.memory_space<vmem>>, vector<128x128xbf16>
    %cst = arith.constant dense<0.000000e+00> : vector<64x128xf32>
    %5 = tpu.matmul %3, %4, %cst {dimension_numbers = #tpu.dot_dimension_numbers<[1], [0], [0], [1], [0, 0, 1, 1], [], []>} : vector<64x128xbf16>, vector<128x128xbf16>, vector<64x128xf32> -> vector<64x128xf32>
    %c0_4 = arith.constant 0 : index
    %c0_5 = arith.constant 0 : index
    %6 = vector.load %arg12[%c0_4, %c0_5] : memref<1x128xf32, #tpu.memory_space<vmem>>, vector<1x128xf32>
    %7 = vector.broadcast %6 : vector<1x128xf32> to vector<64x128xf32>
    %8 = arith.addf %5, %7 : vector<64x128xf32>
    %c0_6 = arith.constant 0 : index
    %c0_7 = arith.constant 0 : index
    %9 = vector.load %arg13[%c0_6, %c0_7] : memref<64x128xf32, #tpu.memory_space<vmem>>, vector<64x128xf32>
    tpu.vector_store %arg13[%c0_6, %c0_7], %8 {strides = array<i32>} : memref<64x128xf32, #tpu.memory_space<vmem>>, vector<64x128xf32>,
    return
  }
  func.func @transform_0(%arg0: i32) -> (i32, i32) {
    %c0_i32 = arith.constant 0 : i32
    %c0_i32_0 = arith.constant 0 : i32
    %c0_i32_1 = arith.constant 0 : i32
    return %c0_i32, %c0_i32_0 : i32, i32
  }
  func.func @transform_1(%arg0: i32) -> (i32, i32) {
    %c0_i32 = arith.constant 0 : i32
    %c0_i32_0 = arith.constant 0 : i32
    %c0_i32_1 = arith.constant 0 : i32
    return %c0_i32, %c0_i32_0 : i32, i32
  }
  func.func @transform_2(%arg0: i32) -> (i32, i32) {
    %c0_i32 = arith.constant 0 : i32
    %c0_i32_0 = arith.constant 0 : i32
    %c0_i32_1 = arith.constant 0 : i32
    return %c0_i32, %c0_i32_0 : i32, i32
  }
  func.func @transform_3(%arg0: i32) -> (i32, i32) {
    %c0_i32 = arith.constant 0 : i32
    %c0_i32_0 = arith.constant 0 : i32
    %c0_i32_1 = arith.constant 0 : i32
    return %c0_i32, %c0_i32_0 : i32, i32
  }
  func.func @transform_4(%arg0: i32) -> (i32, i32) {
    %c0_i32 = arith.constant 0 : i32
    %c0_i32_0 = arith.constant 0 : i32
    %c0_i32_1 = arith.constant 0 : i32
    return %c0_i32, %c0_i32_0 : i32, i32
  }
  func.func @transform_5(%arg0: i32) -> (i32, i32) {
    %c0_i32 = arith.constant 0 : i32
    %c0_i32_0 = arith.constant 0 : i32
    %c0_i32_1 = arith.constant 0 : i32
    return %c0_i32, %c0_i32_0 : i32, i32
  }
  func.func @transform_6(%arg0: i32) -> (i32, i32) {
    %c0_i32 = arith.constant 0 : i32
    %c0_i32_0 = arith.constant 0 : i32
    %c0_i32_1 = arith.constant 0 : i32
    return %c0_i32, %c0_i32_0 : i32, i32
  }
  func.func @transform_7(%arg0: i32) -> (i32, i32) {
    %c0_i32 = arith.constant 0 : i32
    %c0_i32_0 = arith.constant 0 : i32
    %c0_i32_1 = arith.constant 0 : i32
    return %c0_i32, %c0_i32_0 : i32, i32
  }
  func.func @transform_8(%arg0: i32) -> (i32, i32) {
    %c0_i32 = arith.constant 0 : i32
    %c0_i32_0 = arith.constant 0 : i32
    %c0_i32_1 = arith.constant 0 : i32
    return %c0_i32, %c0_i32_0 : i32, i32
  }
  func.func @transform_9(%arg0: i32) -> (i32, i32) {
    %c0_i32 = arith.constant 0 : i32
    %c0_i32_0 = arith.constant 0 : i32
    %c0_i32_1 = arith.constant 0 : i32
    return %c0_i32, %c0_i32_0 : i32, i32
  }
  func.func @transform_10(%arg0: i32) -> (i32, i32) {
    %c0_i32 = arith.constant 0 : i32
    %c0_i32_0 = arith.constant 0 : i32
    return %c0_i32, %arg0 : i32, i32
  }
  func.func @transform_11(%arg0: i32) -> (i32, i32) {
    %c0_i32 = arith.constant 0 : i32
    %c0_i32_0 = arith.constant 0 : i32
    return %c0_i32, %arg0 : i32, i32
  }
  func.func @transform_12(%arg0: i32) -> (i32, i32) {
    %c0_i32 = arith.constant 0 : i32
    %c0_i32_0 = arith.constant 0 : i32
    return %c0_i32, %arg0 : i32, i32
  }
}

</mosaic_0001>

<llo_original>
// kernel: tpu_custom_call.1
$region0: #{tpu_custom_call.1}
  #allocation0 [shape = 'u32[]', space=smem, size = 0x4, offset = 0x4, fixed_abs, tag = 'smem constant byte address 0x4 - core index']
  #allocation1 [shape = 'u32[144,128]{1,0:T(1,128)}', space=vmem, size = 0x12000, scoped, tag = 'internal scratch']
  #allocation2 [shape = 'f32[64,128]{1,0:T(8,128)}', space=vmem, size = 0x8000, scoped, tag = 'scratch operand']
  #allocation3 [shape = 'bf16[64,128]{1,0:T(8,128)(2,1)}', space=vmem, size = 0x4000, scoped, tag = 'scratch operand']
  %s0 = inlined_call_operand.hbm [shape: bf16[64,128], index: 0, kind: input, shape index: {}]
  %s1 = inlined_call_operand.hbm [shape: bf16[64,128], index: 1, kind: input, shape index: {}]
  %s2 = inlined_call_operand.hbm [shape: bf16[128,128], index: 2, kind: input, shape index: {}]
  %s3 = inlined_call_operand.hbm [shape: f32[128,128], index: 3, kind: input, shape index: {}]
  %s4 = inlined_call_operand.vmem [shape: f32[1,128], index: 4, kind: input, shape index: {}]
  %s5 = inlined_call_operand.hbm [shape: f32[128,128], index: 5, kind: input, shape index: {}]
  %s6 = inlined_call_operand.vmem [shape: f32[1,128], index: 6, kind: input, shape index: {}]
  %s7 = inlined_call_operand.hbm [shape: bf16[128,128], index: 7, kind: input, shape index: {}]
  %s8 = inlined_call_operand.hbm [shape: f32[128,128], index: 8, kind: input, shape index: {}]
  %s9 = inlined_call_operand.vmem [shape: f32[1,128], index: 9, kind: input, shape index: {}]
  %s10 = inlined_call_operand.hbm [shape: bf16[128,128], index: 10, kind: input, shape index: {}]
  %s11 = inlined_call_operand.vmem [shape: f32[1,128], index: 11, kind: input, shape index: {}]
  %s12 = inlined_call_operand.hbm [shape: f32[64,128], index: 12, kind: output, shape index: {}]
  %s13 = sld [smem:[#allocation0]]
  $region94: #{tpu_custom_call.1} parent=0
    _
  %s15 = ssub.s32 1, %s13
  %s16 = scalar_select 0, %s15, %s13
  $region1: #{tpu_custom_call.1} parent=0
    #allocation4 [shape = 'u8[16384]{0}', space=vmem, size = 0x4000, scoped, tag = 'input window, operand 0, single buffered']
    #allocation5 [shape = 's32[1]{0}', space=sflag, size = 0x4, scoped, tag = 'scoped memory for tpu_custom_call.1']
    #allocation6 [shape = 's32[1]{0}', space=sflag, size = 0x4, scoped, tag = 'scoped memory for tpu_custom_call.1']
    #allocation7 [shape = 'u8[16384]{0}', space=vmem, size = 0x4000, scoped, tag = 'input window, operand 1, single buffered']
    #allocation8 [shape = 's32[1]{0}', space=sflag, size = 0x4, scoped, tag = 'scoped memory for tpu_custom_call.1']
    #allocation9 [shape = 'u8[32768]{0}', space=vmem, size = 0x8000, scoped, tag = 'input window, operand 2, single buffered']
    #allocation10 [shape = 'u8[65536]{0}', space=vmem, size = 0x10000, scoped, tag = 'input window, operand 3, single buffered']
    #allocation11 [shape = 's32[1]{0}', space=sflag, size = 0x4, scoped, tag = 'scoped memory for tpu_custom_call.1']
    #allocation12 [shape = 'u8[65536]{0}', space=vmem, size = 0x10000, scoped, tag = 'input window, operand 5, single buffered']
    #allocation13 [shape = 'u8[32768]{0}', space=vmem, size = 0x8000, scoped, tag = 'input window, operand 7, single buffered']
    #allocation14 [shape = 's32[1]{0}', space=sflag, size = 0x4, scoped, tag = 'scoped memory for tpu_custom_call.1']
    #allocation15 [shape = 'u8[65536]{0}', space=vmem, size = 0x10000, scoped, tag = 'input window, operand 8, single buffered']
    #allocation16 [shape = 'u8[32768]{0}', space=vmem, size = 0x8000, scoped, tag = 'input window, operand 10, single buffered']
    #allocation17 [shape = 's32[1]{0}', space=sflag, size = 0x4, scoped, tag = 'scoped memory for tpu_custom_call.1']
    #allocation18 [shape = 'u8[32768]{0}', space=vmem, size = 0x8000, scoped, tag = 'output window, operand 0, single buffered']
    %17 = vsyncpa [#allocation5], 0
    %18 = vsyncpa [#allocation8], 0
    %19 = vsyncpa [#allocation11], 0
    %20 = vsyncpa [#allocation14], 0
    %21 = vsyncpa [#allocation17], 0
    %22 = vsyncpa [#allocation6], 0
    // Predicated region
    $region2: #{tpu_custom_call.1} parent=1 // pred_check
      _
    $region3: #{tpu_custom_call.1} parent=1 // pred_check_branch
      %24 = sbr.rel (0) target = $region5
    $region4: #{tpu_custom_call.1} parent=1 // pred_region
      %s26 = ssub.s32 512, 512
      %27 = vsyncadd [#allocation5], %s26
      %s28 = sshll.u32 [#allocation4], 4
      %s29 = int_to_ptr.vmem [resolvable:$true] %s28
      %34 = dma.hbm_to_vmem [thread:$0]  %s0, 512, %s29, [#allocation5], 64, 64, 4
    $region5: #{tpu_custom_call.1} parent=1 // pred_fallthru
      _
    // Predicated region
    $region6: #{tpu_custom_call.1} parent=1 // pred_check
      _
    $region7: #{tpu_custom_call.1} parent=1 // pred_check_branch
      %36 = sbr.rel (0) target = $region9
    $region8: #{tpu_custom_call.1} parent=1 // pred_region
      %s38 = ssub.s32 512, 512
      %39 = vsyncadd [#allocation8], %s38
      %s40 = sshll.u32 [#allocation7], 4
      %s41 = int_to_ptr.vmem [resolvable:$true] %s40
      %46 = dma.hbm_to_vmem [thread:$0]  %s1, 512, %s41, [#allocation8], 64, 64, 4
    $region9: #{tpu_custom_call.1} parent=1 // pred_fallthru
      _
    // Predicated region
    $region10: #{tpu_custom_call.1} parent=1 // pred_check
      _
    $region11: #{tpu_custom_call.1} parent=1 // pred_check_branch
      %48 = sbr.rel (0) target = $region13
    $region12: #{tpu_custom_call.1} parent=1 // pred_region
      %s50 = ssub.s32 1024, 1024
      %51 = vsyncadd [#allocation8], %s50
      %s52 = sshll.u32 [#allocation9], 4
      %s53 = int_to_ptr.vmem [resolvable:$true] %s52
      %58 = dma.hbm_to_vmem [thread:$0]  %s2, 1024, %s53, [#allocation8], 64, 64, 4
    $region13: #{tpu_custom_call.1} parent=1 // pred_fallthru
      _
    // Predicated region
    $region14: #{tpu_custom_call.1} parent=1 // pred_check
      _
    $region15: #{tpu_custom_call.1} parent=1 // pred_check_branch
      %60 = sbr.rel (0) target = $region17
    $region16: #{tpu_custom_call.1} parent=1 // pred_region
      %s62 = ssub.s32 2048, 2048
      %63 = vsyncadd [#allocation11], %s62
      %s64 = sshll.u32 [#allocation10], 4
      %s65 = int_to_ptr.vmem [resolvable:$true] %s64
      %70 = dma.hbm_to_vmem [thread:$0]  %s3, 2048, %s65, [#allocation11], 128, 128, 8
    $region17: #{tpu_custom_call.1} parent=1 // pred_fallthru
      _
    // Predicated region
    $region18: #{tpu_custom_call.1} parent=1 // pred_check
      _
    $region19: #{tpu_custom_call.1} parent=1 // pred_check_branch
      %72 = sbr.rel (0) target = $region21
    $region20: #{tpu_custom_call.1} parent=1 // pred_region
      _
    $region21: #{tpu_custom_call.1} parent=1 // pred_fallthru
      _
    // Predicated region
    $region22: #{tpu_custom_call.1} parent=1 // pred_check
      _
    $region23: #{tpu_custom_call.1} parent=1 // pred_check_branch
      %74 = sbr.rel (0) target = $region25
    $region24: #{tpu_custom_call.1} parent=1 // pred_region
      %s76 = ssub.s32 2048, 2048
      %77 = vsyncadd [#allocation11], %s76
      %s78 = sshll.u32 [#allocation12], 4
      %s79 = int_to_ptr.vmem [resolvable:$true] %s78
      %84 = dma.hbm_to_vmem [thread:$0]  %s5, 2048, %s79, [#allocation11], 128, 128, 8
    $region25: #{tpu_custom_call.1} parent=1 // pred_fallthru
      _
    // Predicated region
    $region26: #{tpu_custom_call.1} parent=1 // pred_check
      _
    $region27: #{tpu_custom_call.1} parent=1 // pred_check_branch
      %86 = sbr.rel (0) target = $region29
    $region28: #{tpu_custom_call.1} parent=1 // pred_region
      _
    $region29: #{tpu_custom_call.1} parent=1 // pred_fallthru
      _
    // Predicated region
    $region30: #{tpu_custom_call.1} parent=1 // pred_check
      _
    $region31: #{tpu_custom_call.1} parent=1 // pred_check_branch
      %88 = sbr.rel (0) target = $region33
    $region32: #{tpu_custom_call.1} parent=1 // pred_region
      %s90 = ssub.s32 1024, 1024
      %91 = vsyncadd [#allocation14], %s90
      %s92 = sshll.u32 [#allocation13], 4
      %s93 = int_to_ptr.vmem [resolvable:$true] %s92
      %98 = dma.hbm_to_vmem [thread:$0]  %s7, 1024, %s93, [#allocation14], 64, 64, 4
    $region33: #{tpu_custom_call.1} parent=1 // pred_fallthru
      _
    // Predicated region
    $region34: #{tpu_custom_call.1} parent=1 // pred_check
      _
    $region35: #{tpu_custom_call.1} parent=1 // pred_check_branch
      %100 = sbr.rel (0) target = $region37
    $region36: #{tpu_custom_call.1} parent=1 // pred_region
      %s102 = ssub.s32 2048, 2048
      %103 = vsyncadd [#allocation14], %s102
      %s104 = sshll.u32 [#allocation15], 4
      %s105 = int_to_ptr.vmem [resolvable:$true] %s104
      %110 = dma.hbm_to_vmem [thread:$0]  %s8, 2048, %s105, [#allocation14], 128, 128, 8
    $region37: #{tpu_custom_call.1} parent=1 // pred_fallthru
      _
    // Predicated region
    $region38: #{tpu_custom_call.1} parent=1 // pred_check
      _
    $region39: #{tpu_custom_call.1} parent=1 // pred_check_branch
      %112 = sbr.rel (0) target = $region41
    $region40: #{tpu_custom_call.1} parent=1 // pred_region
      _
    $region41: #{tpu_custom_call.1} parent=1 // pred_fallthru
      _
    // Predicated region
    $region42: #{tpu_custom_call.1} parent=1 // pred_check
      _
    $region43: #{tpu_custom_call.1} parent=1 // pred_check_branch
      %114 = sbr.rel (0) target = $region45
    $region44: #{tpu_custom_call.1} parent=1 // pred_region
      %s116 = ssub.s32 1024, 1024
      %117 = vsyncadd [#allocation17], %s116
      %s118 = sshll.u32 [#allocation16], 4
      %s119 = int_to_ptr.vmem [resolvable:$true] %s118
      %124 = dma.hbm_to_vmem [thread:$0]  %s10, 1024, %s119, [#allocation17], 64, 64, 4
    $region45: #{tpu_custom_call.1} parent=1 // pred_fallthru
      _
    // Predicated region
    $region46: #{tpu_custom_call.1} parent=1 // pred_check
      _
    $region47: #{tpu_custom_call.1} parent=1 // pred_check_branch
      %126 = sbr.rel (0) target = $region49
    $region48: #{tpu_custom_call.1} parent=1 // pred_region
      _
    $region49: #{tpu_custom_call.1} parent=1 // pred_fallthru
      _
    // Predicated region
    $region50: #{tpu_custom_call.1} parent=1 // pred_check
      _
    $region51: #{tpu_custom_call.1} parent=1 // pred_check_branch
      %128 = sbr.rel (0) target = $region53
    $region52: #{tpu_custom_call.1} parent=1 // pred_region
      %129 = dma.done [#allocation5], 512
    $region53: #{tpu_custom_call.1} parent=1 // pred_fallthru
      _
    // Predicated region
    $region54: #{tpu_custom_call.1} parent=1 // pred_check
      _
    $region55: #{tpu_custom_call.1} parent=1 // pred_check_branch
      %131 = sbr.rel (0) target = $region57
    $region56: #{tpu_custom_call.1} parent=1 // pred_region
      %132 = dma.done [#allocation8], 512
    $region57: #{tpu_custom_call.1} parent=1 // pred_fallthru
      _
    // Predicated region
    $region58: #{tpu_custom_call.1} parent=1 // pred_check
      _
    $region59: #{tpu_custom_call.1} parent=1 // pred_check_branch
      %134 = sbr.rel (0) target = $region61
    $region60: #{tpu_custom_call.1} parent=1 // pred_region
      %135 = dma.done [#allocation8], 1024
    $region61: #{tpu_custom_call.1} parent=1 // pred_fallthru
      _
    // Predicated region
    $region62: #{tpu_custom_call.1} parent=1 // pred_check
      _
    $region63: #{tpu_custom_call.1} parent=1 // pred_check_branch
      %137 = sbr.rel (0) target = $region65
    $region64: #{tpu_custom_call.1} parent=1 // pred_region
      %138 = dma.done [#allocation11], 2048
    $region65: #{tpu_custom_call.1} parent=1 // pred_fallthru
      _
    // Predicated region
    $region66: #{tpu_custom_call.1} parent=1 // pred_check
      _
    $region67: #{tpu_custom_call.1} parent=1 // pred_check_branch
      %140 = sbr.rel (0) target = $region69
    $region68: #{tpu_custom_call.1} parent=1 // pred_region
      %141 = dma.done [#allocation11], 2048
    $region69: #{tpu_custom_call.1} parent=1 // pred_fallthru
      _
    // Predicated region
    $region70: #{tpu_custom_call.1} parent=1 // pred_check
      _
    $region71: #{tpu_custom_call.1} parent=1 // pred_check_branch
      %143 = sbr.rel (0) target = $region73
    $region72: #{tpu_custom_call.1} parent=1 // pred_region
      %144 = dma.done [#allocation14], 1024
    $region73: #{tpu_custom_call.1} parent=1 // pred_fallthru
      _
    // Predicated region
    $region74: #{tpu_custom_call.1} parent=1 // pred_check
      _
    $region75: #{tpu_custom_call.1} parent=1 // pred_check_branch
      %146 = sbr.rel (0) target = $region77
    $region76: #{tpu_custom_call.1} parent=1 // pred_region
      %147 = dma.done [#allocation14], 2048
    $region77: #{tpu_custom_call.1} parent=1 // pred_fallthru
      _
    // Predicated region
    $region78: #{tpu_custom_call.1} parent=1 // pred_check
      _
    $region79: #{tpu_custom_call.1} parent=1 // pred_check_branch
      %149 = sbr.rel (0) target = $region81
    $region80: #{tpu_custom_call.1} parent=1 // pred_region
      %150 = dma.done [#allocation17], 1024
    $region81: #{tpu_custom_call.1} parent=1 // pred_fallthru
      _
    %p152 = scmp.eq.s32.totalorder 0, 0
    // Predicated region
    $region82: #{tpu_custom_call.1} parent=1 // pred_check
      %p153 = pneg %p152
    $region83: #{tpu_custom_call.1} parent=1 // pred_check_branch
      %155 = sbr.rel (%p153) target = $region85
    $region84: #{tpu_custom_call.1} parent=1 // pred_region
      %v156 = vld [vmem:[#allocation4] sm:$0xf]
      %v157 = vld [vmem:[#allocation4 + $0x4] sm:$0xf]
      %v158 = vld [vmem:[#allocation4 + $0x8] sm:$0xf]
      %v159 = vld [vmem:[#allocation4 + $0xc] sm:$0xf]
      %v160 = vld [vmem:[#allocation4 + $0x10] sm:$0xf]
      %v161 = vld [vmem:[#allocation4 + $0x14] sm:$0xf]
      %v162 = vld [vmem:[#allocation4 + $0x18] sm:$0xf]
      %v163 = vld [vmem:[#allocation4 + $0x1c] sm:$0xf]
      %v164 = vld [vmem:[#allocation9] sm:$0xf]
      %v165 = vld [vmem:[#allocation9 + $0x4] sm:$0xf]
      %v166 = vld [vmem:[#allocation9 + $0x8] sm:$0xf]
      %v167 = vld [vmem:[#allocation9 + $0xc] sm:$0xf]
      %v168 = vld [vmem:[#allocation9 + $0x10] sm:$0xf]
      %v169 = vld [vmem:[#allocation9 + $0x14] sm:$0xf]
      %v170 = vld [vmem:[#allocation9 + $0x18] sm:$0xf]
      %v171 = vld [vmem:[#allocation9 + $0x1c] sm:$0xf]
      %v172 = vld [vmem:[#allocation9 + $0x20] sm:$0xf]
      %v173 = vld [vmem:[#allocation9 + $0x24] sm:$0xf]
      %v174 = vld [vmem:[#allocation9 + $0x28] sm:$0xf]
      %v175 = vld [vmem:[#allocation9 + $0x2c] sm:$0xf]
      %v176 = vld [vmem:[#allocation9 + $0x30] sm:$0xf]
      %v177 = vld [vmem:[#allocation9 + $0x34] sm:$0xf]
      %v178 = vld [vmem:[#allocation9 + $0x38] sm:$0xf]
      %v179 = vld [vmem:[#allocation9 + $0x3c] sm:$0xf]
      %v180 = vld [vmem:[%s4] sm:$0x1]
      %v182 = vlaneseq
      %v183 = vshrl.u32 %v182, 7
      %v184 = vsub.s32 0, %v183
      %v185 = vrot.slane %v180, %v184
      %v195 = vunpack.c.l.b16 %v156
      %v196 = vunpack.c.l.b16 %v157
      %v197 = vunpack.c.l.b16 %v158
      %v198 = vunpack.c.l.b16 %v159
      %v199 = vunpack.c.l.b16 %v160
      %v200 = vunpack.c.l.b16 %v161
      %v201 = vunpack.c.l.b16 %v162
      %v202 = vunpack.c.l.b16 %v163
      %v203 = vpack.c.b16 %v196, %v195
      %v204 = vpack.c.b16 %v198, %v197
      %v205 = vpack.c.b16 %v200, %v199
      %v206 = vpack.c.b16 %v202, %v201
      %v227 = vunpack.c.l.b16 %v164
      %v228 = vunpack.c.l.b16 %v165
      %v229 = vunpack.c.l.b16 %v166
      %v230 = vunpack.c.l.b16 %v167
      %v231 = vunpack.c.l.b16 %v168
      %v232 = vunpack.c.l.b16 %v169
      %v233 = vunpack.c.l.b16 %v170
      %v234 = vunpack.c.l.b16 %v171
      %v235 = vunpack.c.l.b16 %v172
      %v236 = vunpack.c.l.b16 %v173
      %v237 = vunpack.c.l.b16 %v174
      %v238 = vunpack.c.l.b16 %v175
      %v239 = vunpack.c.l.b16 %v176
      %v240 = vunpack.c.l.b16 %v177
      %v241 = vunpack.c.l.b16 %v178
      %v242 = vunpack.c.l.b16 %v179
      %v243 = vpack.c.b16 %v228, %v227
      %v244 = vpack.c.b16 %v230, %v229
      %v245 = vpack.c.b16 %v232, %v231
      %v246 = vpack.c.b16 %v234, %v233
      %v247 = vpack.c.b16 %v236, %v235
      %v248 = vpack.c.b16 %v238, %v237
      %v249 = vpack.c.b16 %v240, %v239
      %v250 = vpack.c.b16 %v242, %v241
      %259 = vmatprep.subr.bf16.mxu0 0
      %260 = vmatpush1.bf16.msra.mxu0 %v250
      %261 = vmatprep.subr.bf16.mxu0 0
      %262 = vmatpush1.bf16.msra.mxu0 %v249
      %263 = vmatprep.subr.bf16.mxu0 0
      %264 = vmatpush1.bf16.msra.mxu0 %v248
      %265 = vmatprep.subr.bf16.mxu0 0
      %266 = vmatpush1.bf16.msra.mxu0 %v247
      %267 = vmatprep.subr.bf16.mxu0 0
      %268 = vmatpush1.bf16.msra.mxu0 %v246
      %269 = vmatprep.subr.bf16.mxu0 0
      %270 = vmatpush1.bf16.msra.mxu0 %v245
      %271 = vmatprep.subr.bf16.mxu0 0
      %272 = vmatpush1.bf16.msra.mxu0 %v244
      %273 = vmatprep.subr.bf16.mxu0 0
      %274 = vmatpush1.bf16.msra.mxu0 %v243
      %275 = vmatprep.subr.bf16.mxu0 0
      %276 = vmatpush2.bf16.msra.mxu0 0
      %277 = vmatprep.subr.bf16.mxu0 0
      %278 = vmatpush2.bf16.msra.mxu0 0
      %279 = vmatprep.subr.bf16.mxu0 0
      %280 = vmatpush2.bf16.msra.mxu0 0
      %281 = vmatprep.subr.bf16.mxu0 0
      %282 = vmatpush2.bf16.msra.mxu0 0
      %283 = vmatprep.subr.bf16.mxu0 0
      %284 = vmatpush2.bf16.msra.mxu0 0
      %285 = vmatprep.subr.bf16.mxu0 0
      %286 = vmatpush2.bf16.msra.mxu0 0
      %287 = vmatprep.subr.bf16.mxu0 0
      %288 = vmatpush2.bf16.msra.mxu0 0
      %289 = vmatprep.subr.bf16.mxu0 0
      %290 = vmatpush2.bf16.msra.mxu0 0
      %291 = vmatprep.mubr.bf16.mxu0 0
      %292 = vmatmul.mubr.bf16.gmra.mxu0 %v203
      %v293 = vpop.f32.mrf.mxu0
      %v294 = vadd.f32 %v185, %v293
      %v295 = vpop.f32.mrf.mxu0
      %v296 = vpop.f32.mrf.mxu0
      %v297 = vadd.f32 %v185, %v296
      %v298 = vpop.f32.mrf.mxu0
      %299 = vmatprep.mubr.bf16.mxu0 0
      %300 = vmatmul.mubr.bf16.gmra.mxu0 %v204
      %v301 = vpop.f32.mrf.mxu0
      %v302 = vadd.f32 %v185, %v301
      %v303 = vpop.f32.mrf.mxu0
      %v304 = vpop.f32.mrf.mxu0
      %v305 = vadd.f32 %v185, %v304
      %v306 = vpop.f32.mrf.mxu0
      %307 = vmatprep.mubr.bf16.mxu0 0
      %308 = vmatmul.mubr.bf16.gmra.mxu0 %v205
      %v309 = vpop.f32.mrf.mxu0
      %v310 = vadd.f32 %v185, %v309
      %v311 = vpop.f32.mrf.mxu0
      %v312 = vpop.f32.mrf.mxu0
      %v313 = vadd.f32 %v185, %v312
      %v314 = vpop.f32.mrf.mxu0
      %315 = vmatprep.mubr.bf16.mxu0 0
      %316 = vmatmul.mubr.bf16.gmra.mxu0 %v206
      %v317 = vpop.f32.mrf.mxu0
      %v318 = vadd.f32 %v185, %v317
      %v319 = vpop.f32.mrf.mxu0
      %v320 = vpop.f32.mrf.mxu0
      %v321 = vadd.f32 %v185, %v320
      %v322 = vpop.f32.mrf.mxu0
      %323 = vdwg.mxu0
      %324 = vst [vmem:[#allocation2] sm:$0xff] %v294
      %325 = vst [vmem:[#allocation2 + $0x8] sm:$0xff] %v297
      %326 = vst [vmem:[#allocation2 + $0x10] sm:$0xff] %v302
      %327 = vst [vmem:[#allocation2 + $0x18] sm:$0xff] %v305
      %328 = vst [vmem:[#allocation2 + $0x20] sm:$0xff] %v310
      %329 = vst [vmem:[#allocation2 + $0x28] sm:$0xff] %v313
      %330 = vst [vmem:[#allocation2 + $0x30] sm:$0xff] %v318
      %331 = vst [vmem:[#allocation2 + $0x38] sm:$0xff] %v321
      %v332 = vld [vmem:[#allocation10] sm:$0xff]
      %v333 = vld [vmem:[#allocation10 + $0x8] sm:$0xff]
      %v334 = vld [vmem:[#allocation10 + $0x10] sm:$0xff]
      %v335 = vld [vmem:[#allocation10 + $0x18] sm:$0xff]
      %v336 = vld [vmem:[#allocation10 + $0x20] sm:$0xff]
      %v337 = vld [vmem:[#allocation10 + $0x28] sm:$0xff]
      %v338 = vld [vmem:[#allocation10 + $0x30] sm:$0xff]
      %v339 = vld [vmem:[#allocation10 + $0x38] sm:$0xff]
      %v340 = vld [vmem:[#allocation10 + $0x40] sm:$0xff]
      %v341 = vld [vmem:[#allocation10 + $0x48] sm:$0xff]
      %v342 = vld [vmem:[#allocation10 + $0x50] sm:$0xff]
      %v343 = vld [vmem:[#allocation10 + $0x58] sm:$0xff]
      %v344 = vld [vmem:[#allocation10 + $0x60] sm:$0xff]
      %v345 = vld [vmem:[#allocation10 + $0x68] sm:$0xff]
      %v346 = vld [vmem:[#allocation10 + $0x70] sm:$0xff]
      %v347 = vld [vmem:[#allocation10 + $0x78] sm:$0xff]
      %v348 = vld [vmem:[#allocation2] sm:$0xff]
      %349 = vmatprep.subr.mxu0 0.0
      %350 = vmatpush1.msra.mxu0 %v347
      %351 = vmatprep.subr.mxu0 0.0
      %352 = vmatpush1.msra.mxu0 %v346
      %353 = vmatprep.subr.mxu0 0.0
      %354 = vmatpush1.msra.mxu0 %v345
      %355 = vmatprep.subr.mxu0 0.0
      %356 = vmatpush1.msra.mxu0 %v344
      %357 = vmatprep.subr.mxu0 0.0
      %358 = vmatpush1.msra.mxu0 %v343
      %359 = vmatprep.subr.mxu0 0.0
      %360 = vmatpush1.msra.mxu0 %v342
      %361 = vmatprep.subr.mxu0 0.0
      %362 = vmatpush1.msra.mxu0 %v341
      %363 = vmatprep.subr.mxu0 0.0
      %364 = vmatpush1.msra.mxu0 %v340
      %365 = vmatprep.subr.mxu0 0.0
      %366 = vmatpush1.msra.mxu0 %v339
      %367 = vmatprep.subr.mxu0 0.0
      %368 = vmatpush1.msra.mxu0 %v338
      %369 = vmatprep.subr.mxu0 0.0
      %370 = vmatpush1.msra.mxu0 %v337
      %371 = vmatprep.subr.mxu0 0.0
      %372 = vmatpush1.msra.mxu0 %v336
      %373 = vmatprep.subr.mxu0 0.0
      %374 = vmatpush1.msra.mxu0 %v335
      %375 = vmatprep.subr.mxu0 0.0
      %376 = vmatpush1.msra.mxu0 %v334
      %377 = vmatprep.subr.mxu0 0.0
      %378 = vmatpush1.msra.mxu0 %v333
      %379 = vmatprep.subr.mxu0 0.0
      %380 = vmatpush1.msra.mxu0 %v332
      %381 = vmatprep.subr.mxu0 0.0
      %382 = vmatpush2.msra.mxu0 0.0
      %383 = vmatprep.subr.mxu0 0.0
      %384 = vmatpush2.msra.mxu0 0.0
      %385 = vmatprep.subr.mxu0 0.0
      %386 = vmatpush2.msra.mxu0 0.0
      %387 = vmatprep.subr.mxu0 0.0
      %388 = vmatpush2.msra.mxu0 0.0
      %389 = vmatprep.subr.mxu0 0.0
      %390 = vmatpush2.msra.mxu0 0.0
      %391 = vmatprep.subr.mxu0 0.0
      %392 = vmatpush2.msra.mxu0 0.0
      %393 = vmatprep.subr.mxu0 0.0
      %394 = vmatpush2.msra.mxu0 0.0
      %395 = vmatprep.subr.mxu0 0.0
      %396 = vmatpush2.msra.mxu0 0.0
      %397 = vmatprep.subr.mxu0 0.0
      %398 = vmatpush2.msra.mxu0 0.0
      %399 = vmatprep.subr.mxu0 0.0
      %400 = vmatpush2.msra.mxu0 0.0
      %401 = vmatprep.subr.mxu0 0.0
      %402 = vmatpush2.msra.mxu0 0.0
      %403 = vmatprep.subr.mxu0 0.0
      %404 = vmatpush2.msra.mxu0 0.0
      %405 = vmatprep.subr.mxu0 0.0
      %406 = vmatpush2.msra.mxu0 0.0
      %407 = vmatprep.subr.mxu0 0.0
      %408 = vmatpush2.msra.mxu0 0.0
      %409 = vmatprep.subr.mxu0 0.0
      %410 = vmatpush2.msra.mxu0 0.0
      %411 = vmatprep.subr.mxu0 0.0
      %412 = vmatpush2.msra.mxu0 0.0
      %413 = vmatprep.mubr.f32.mxu0 0.0
      %414 = vmatmul.mubr.f32.gmra.mxu0 0.0
      %v415 = vpop.f32.mrf.mxu0
      %v416 = vadd.f32 0.0, %v415
      %v417 = vpop.f32.mrf.mxu0
      %418 = vdwg.mxu0
      %v419 = vadd.f32 %v348, %v416
      %v420 = vtanh.pop %v419
      %s421 = scalar_lea.vmem [#allocation2], 8
      %v422 = vld [vmem:[%s421] sm:$0xff]
      %423 = vmatprep.subr.mxu0 0.0
      %424 = vmatpush1.msra.mxu0 %v347
      %425 = vmatprep.subr.mxu0 0.0
      %426 = vmatpush1.msra.mxu0 %v346
      %427 = vmatprep.subr.mxu0 0.0
      %428 = vmatpush1.msra.mxu0 %v345
      %429 = vmatprep.subr.mxu0 0.0
      %430 = vmatpush1.msra.mxu0 %v344
      %431 = vmatprep.subr.mxu0 0.0
      %432 = vmatpush1.msra.mxu0 %v343
      %433 = vmatprep.subr.mxu0 0.0
      %434 = vmatpush1.msra.mxu0 %v342
      %435 = vmatprep.subr.mxu0 0.0
      %436 = vmatpush1.msra.mxu0 %v341
      %437 = vmatprep.subr.mxu0 0.0
      %438 = vmatpush1.msra.mxu0 %v340
      %439 = vmatprep.subr.mxu0 0.0
      %440 = vmatpush1.msra.mxu0 %v339
      %441 = vmatprep.subr.mxu0 0.0
      %442 = vmatpush1.msra.mxu0 %v338
      %443 = vmatprep.subr.mxu0 0.0
      %444 = vmatpush1.msra.mxu0 %v337
      %445 = vmatprep.subr.mxu0 0.0
      %446 = vmatpush1.msra.mxu0 %v336
      %447 = vmatprep.subr.mxu0 0.0
      %448 = vmatpush1.msra.mxu0 %v335
      %449 = vmatprep.subr.mxu0 0.0
      %450 = vmatpush1.msra.mxu0 %v334
      %451 = vmatprep.subr.mxu0 0.0
      %452 = vmatpush1.msra.mxu0 %v333
      %453 = vmatprep.subr.mxu0 0.0
      %454 = vmatpush1.msra.mxu0 %v332
      %455 = vmatprep.subr.mxu0 0.0
      %456 = vmatpush2.msra.mxu0 0.0
      %457 = vmatprep.subr.mxu0 0.0
      %458 = vmatpush2.msra.mxu0 0.0
      %459 = vmatprep.subr.mxu0 0.0
      %460 = vmatpush2.msra.mxu0 0.0
      %461 = vmatprep.subr.mxu0 0.0
      %462 = vmatpush2.msra.mxu0 0.0
      %463 = vmatprep.subr.mxu0 0.0
      %464 = vmatpush2.msra.mxu0 0.0
      %465 = vmatprep.subr.mxu0 0.0
      %466 = vmatpush2.msra.mxu0 0.0
      %467 = vmatprep.subr.mxu0 0.0
      %468 = vmatpush2.msra.mxu0 0.0
      %469 = vmatprep.subr.mxu0 0.0
      %470 = vmatpush2.msra.mxu0 0.0
      %471 = vmatprep.subr.mxu0 0.0
      %472 = vmatpush2.msra.mxu0 0.0
      %473 = vmatprep.subr.mxu0 0.0
      %474 = vmatpush2.msra.mxu0 0.0
      %475 = vmatprep.subr.mxu0 0.0
      %476 = vmatpush2.msra.mxu0 0.0
      %477 = vmatprep.subr.mxu0 0.0
      %478 = vmatpush2.msra.mxu0 0.0
      %479 = vmatprep.subr.mxu0 0.0
      %480 = vmatpush2.msra.mxu0 0.0
      %481 = vmatprep.subr.mxu0 0.0
      %482 = vmatpush2.msra.mxu0 0.0
      %483 = vmatprep.subr.mxu0 0.0
      %484 = vmatpush2.msra.mxu0 0.0
      %485 = vmatprep.subr.mxu0 0.0
      %486 = vmatpush2.msra.mxu0 0.0
      %487 = vmatprep.mubr.f32.mxu0 0.0
      %488 = vmatmul.mubr.f32.gmra.mxu0 %v420
      %v489 = vpop.f32.mrf.mxu0
      %v490 = vadd.f32 0.0, %v489
      %v491 = vpop.f32.mrf.mxu0
      %492 = vdwg.mxu0
      %v493 = vadd.f32 %v422, %v490
      %v494 = vtanh.pop %v493
      %s495 = scalar_lea.vmem [#allocation2], 16
      %v496 = vld [vmem:[%s495] sm:$0xff]
      %497 = vmatprep.subr.mxu0 0.0
      %498 = vmatpush1.msra.mxu0 %v347
      %499 = vmatprep.subr.mxu0 0.0
      %500 = vmatpush1.msra.mxu0 %v346
      %501 = vmatprep.subr.mxu0 0.0
      %502 = vmatpush1.msra.mxu0 %v345
      %503 = vmatprep.subr.mxu0 0.0
      %504 = vmatpush1.msra.mxu0 %v344
      %505 = vmatprep.subr.mxu0 0.0
      %506 = vmatpush1.msra.mxu0 %v343
      %507 = vmatprep.subr.mxu0 0.0
      %508 = vmatpush1.msra.mxu0 %v342
      %509 = vmatprep.subr.mxu0 0.0
      %510 = vmatpush1.msra.mxu0 %v341
      %511 = vmatprep.subr.mxu0 0.0
      %512 = vmatpush1.msra.mxu0 %v340
      %513 = vmatprep.subr.mxu0 0.0
      %514 = vmatpush1.msra.mxu0 %v339
      %515 = vmatprep.subr.mxu0 0.0
      %516 = vmatpush1.msra.mxu0 %v338
      %517 = vmatprep.subr.mxu0 0.0
      %518 = vmatpush1.msra.mxu0 %v337
      %519 = vmatprep.subr.mxu0 0.0
      %520 = vmatpush1.msra.mxu0 %v336
      %521 = vmatprep.subr.mxu0 0.0
      %522 = vmatpush1.msra.mxu0 %v335
      %523 = vmatprep.subr.mxu0 0.0
      %524 = vmatpush1.msra.mxu0 %v334
      %525 = vmatprep.subr.mxu0 0.0
      %526 = vmatpush1.msra.mxu0 %v333
      %527 = vmatprep.subr.mxu0 0.0
      %528 = vmatpush1.msra.mxu0 %v332
      %529 = vmatprep.subr.mxu0 0.0
      %530 = vmatpush2.msra.mxu0 0.0
      %531 = vmatprep.subr.mxu0 0.0
      %532 = vmatpush2.msra.mxu0 0.0
      %533 = vmatprep.subr.mxu0 0.0
      %534 = vmatpush2.msra.mxu0 0.0
      %535 = vmatprep.subr.mxu0 0.0
      %536 = vmatpush2.msra.mxu0 0.0
      %537 = vmatprep.subr.mxu0 0.0
      %538 = vmatpush2.msra.mxu0 0.0
      %539 = vmatprep.subr.mxu0 0.0
      %540 = vmatpush2.msra.mxu0 0.0
      %541 = vmatprep.subr.mxu0 0.0
      %542 = vmatpush2.msra.mxu0 0.0
      %543 = vmatprep.subr.mxu0 0.0
      %544 = vmatpush2.msra.mxu0 0.0
      %545 = vmatprep.subr.mxu0 0.0
      %546 = vmatpush2.msra.mxu0 0.0
      %547 = vmatprep.subr.mxu0 0.0
      %548 = vmatpush2.msra.mxu0 0.0
      %549 = vmatprep.subr.mxu0 0.0
      %550 = vmatpush2.msra.mxu0 0.0
      %551 = vmatprep.subr.mxu0 0.0
      %552 = vmatpush2.msra.mxu0 0.0
      %553 = vmatprep.subr.mxu0 0.0
      %554 = vmatpush2.msra.mxu0 0.0
      %555 = vmatprep.subr.mxu0 0.0
      %556 = vmatpush2.msra.mxu0 0.0
      %557 = vmatprep.subr.mxu0 0.0
      %558 = vmatpush2.msra.mxu0 0.0
      %559 = vmatprep.subr.mxu0 0.0
      %560 = vmatpush2.msra.mxu0 0.0
      %561 = vmatprep.mubr.f32.mxu0 0.0
      %562 = vmatmul.mubr.f32.gmra.mxu0 %v494
      %v563 = vpop.f32.mrf.mxu0
      %v564 = vadd.f32 0.0, %v563
      %v565 = vpop.f32.mrf.mxu0
      %566 = vdwg.mxu0
      %v567 = vadd.f32 %v496, %v564
      %v568 = vtanh.pop %v567
      %s569 = scalar_lea.vmem [#allocation2], 24
      %v570 = vld [vmem:[%s569] sm:$0xff]
      %571 = vmatprep.subr.mxu0 0.0
      %572 = vmatpush1.msra.mxu0 %v347
      %573 = vmatprep.subr.mxu0 0.0
      %574 = vmatpush1.msra.mxu0 %v346
      %575 = vmatprep.subr.mxu0 0.0
      %576 = vmatpush1.msra.mxu0 %v345
      %577 = vmatprep.subr.mxu0 0.0
      %578 = vmatpush1.msra.mxu0 %v344
      %579 = vmatprep.subr.mxu0 0.0
      %580 = vmatpush1.msra.mxu0 %v343
      %581 = vmatprep.subr.mxu0 0.0
      %582 = vmatpush1.msra.mxu0 %v342
      %583 = vmatprep.subr.mxu0 0.0
      %584 = vmatpush1.msra.mxu0 %v341
      %585 = vmatprep.subr.mxu0 0.0
      %586 = vmatpush1.msra.mxu0 %v340
      %587 = vmatprep.subr.mxu0 0.0
      %588 = vmatpush1.msra.mxu0 %v339
      %589 = vmatprep.subr.mxu0 0.0
      %590 = vmatpush1.msra.mxu0 %v338
      %591 = vmatprep.subr.mxu0 0.0
      %592 = vmatpush1.msra.mxu0 %v337
      %593 = vmatprep.subr.mxu0 0.0
      %594 = vmatpush1.msra.mxu0 %v336
      %595 = vmatprep.subr.mxu0 0.0
      %596 = vmatpush1.msra.mxu0 %v335
      %597 = vmatprep.subr.mxu0 0.0
      %598 = vmatpush1.msra.mxu0 %v334
      %599 = vmatprep.subr.mxu0 0.0
      %600 = vmatpush1.msra.mxu0 %v333
      %601 = vmatprep.subr.mxu0 0.0
      %602 = vmatpush1.msra.mxu0 %v332
      %603 = vmatprep.subr.mxu0 0.0
      %604 = vmatpush2.msra.mxu0 0.0
      %605 = vmatprep.subr.mxu0 0.0
      %606 = vmatpush2.msra.mxu0 0.0
      %607 = vmatprep.subr.mxu0 0.0
      %608 = vmatpush2.msra.mxu0 0.0
      %609 = vmatprep.subr.mxu0 0.0
      %610 = vmatpush2.msra.mxu0 0.0
      %611 = vmatprep.subr.mxu0 0.0
      %612 = vmatpush2.msra.mxu0 0.0
      %613 = vmatprep.subr.mxu0 0.0
      %614 = vmatpush2.msra.mxu0 0.0
      %615 = vmatprep.subr.mxu0 0.0
      %616 = vmatpush2.msra.mxu0 0.0
      %617 = vmatprep.subr.mxu0 0.0
      %618 = vmatpush2.msra.mxu0 0.0
      %619 = vmatprep.subr.mxu0 0.0
      %620 = vmatpush2.msra.mxu0 0.0
      %621 = vmatprep.subr.mxu0 0.0
      %622 = vmatpush2.msra.mxu0 0.0
      %623 = vmatprep.subr.mxu0 0.0
      %624 = vmatpush2.msra.mxu0 0.0
      %625 = vmatprep.subr.mxu0 0.0
      %626 = vmatpush2.msra.mxu0 0.0
      %627 = vmatprep.subr.mxu0 0.0
      %628 = vmatpush2.msra.mxu0 0.0
      %629 = vmatprep.subr.mxu0 0.0
      %630 = vmatpush2.msra.mxu0 0.0
      %631 = vmatprep.subr.mxu0 0.0
      %632 = vmatpush2.msra.mxu0 0.0
      %633 = vmatprep.subr.mxu0 0.0
      %634 = vmatpush2.msra.mxu0 0.0
      %635 = vmatprep.mubr.f32.mxu0 0.0
      %636 = vmatmul.mubr.f32.gmra.mxu0 %v568
      %v637 = vpop.f32.mrf.mxu0
      %v638 = vadd.f32 0.0, %v637
      %v639 = vpop.f32.mrf.mxu0
      %640 = vdwg.mxu0
      %v641 = vadd.f32 %v570, %v638
      %v642 = vtanh.pop %v641
      %s643 = scalar_lea.vmem [#allocation2], 32
      %v644 = vld [vmem:[%s643] sm:$0xff]
      %645 = vmatprep.subr.mxu0 0.0
      %646 = vmatpush1.msra.mxu0 %v347
      %647 = vmatprep.subr.mxu0 0.0
      %648 = vmatpush1.msra.mxu0 %v346
      %649 = vmatprep.subr.mxu0 0.0
      %650 = vmatpush1.msra.mxu0 %v345
      %651 = vmatprep.subr.mxu0 0.0
      %652 = vmatpush1.msra.mxu0 %v344
      %653 = vmatprep.subr.mxu0 0.0
      %654 = vmatpush1.msra.mxu0 %v343
      %655 = vmatprep.subr.mxu0 0.0
      %656 = vmatpush1.msra.mxu0 %v342
      %657 = vmatprep.subr.mxu0 0.0
      %658 = vmatpush1.msra.mxu0 %v341
      %659 = vmatprep.subr.mxu0 0.0
      %660 = vmatpush1.msra.mxu0 %v340
      %661 = vmatprep.subr.mxu0 0.0
      %662 = vmatpush1.msra.mxu0 %v339
      %663 = vmatprep.subr.mxu0 0.0
      %664 = vmatpush1.msra.mxu0 %v338
      %665 = vmatprep.subr.mxu0 0.0
      %666 = vmatpush1.msra.mxu0 %v337
      %667 = vmatprep.subr.mxu0 0.0
      %668 = vmatpush1.msra.mxu0 %v336
      %669 = vmatprep.subr.mxu0 0.0
      %670 = vmatpush1.msra.mxu0 %v335
      %671 = vmatprep.subr.mxu0 0.0
      %672 = vmatpush1.msra.mxu0 %v334
      %673 = vmatprep.subr.mxu0 0.0
      %674 = vmatpush1.msra.mxu0 %v333
      %675 = vmatprep.subr.mxu0 0.0
      %676 = vmatpush1.msra.mxu0 %v332
      %677 = vmatprep.subr.mxu0 0.0
      %678 = vmatpush2.msra.mxu0 0.0
      %679 = vmatprep.subr.mxu0 0.0
      %680 = vmatpush2.msra.mxu0 0.0
      %681 = vmatprep.subr.mxu0 0.0
      %682 = vmatpush2.msra.mxu0 0.0
      %683 = vmatprep.subr.mxu0 0.0
      %684 = vmatpush2.msra.mxu0 0.0
      %685 = vmatprep.subr.mxu0 0.0
      %686 = vmatpush2.msra.mxu0 0.0
      %687 = vmatprep.subr.mxu0 0.0
      %688 = vmatpush2.msra.mxu0 0.0
      %689 = vmatprep.subr.mxu0 0.0
      %690 = vmatpush2.msra.mxu0 0.0
      %691 = vmatprep.subr.mxu0 0.0
      %692 = vmatpush2.msra.mxu0 0.0
      %693 = vmatprep.subr.mxu0 0.0
      %694 = vmatpush2.msra.mxu0 0.0
      %695 = vmatprep.subr.mxu0 0.0
      %696 = vmatpush2.msra.mxu0 0.0
      %697 = vmatprep.subr.mxu0 0.0
      %698 = vmatpush2.msra.mxu0 0.0
      %699 = vmatprep.subr.mxu0 0.0
      %700 = vmatpush2.msra.mxu0 0.0
      %701 = vmatprep.subr.mxu0 0.0
      %702 = vmatpush2.msra.mxu0 0.0
      %703 = vmatprep.subr.mxu0 0.0
      %704 = vmatpush2.msra.mxu0 0.0
      %705 = vmatprep.subr.mxu0 0.0
      %706 = vmatpush2.msra.mxu0 0.0
      %707 = vmatprep.subr.mxu0 0.0
      %708 = vmatpush2.msra.mxu0 0.0
      %709 = vmatprep.mubr.f32.mxu0 0.0
      %710 = vmatmul.mubr.f32.gmra.mxu0 %v642
      %v711 = vpop.f32.mrf.mxu0
      %v712 = vadd.f32 0.0, %v711
      %v713 = vpop.f32.mrf.mxu0
      %714 = vdwg.mxu0
      %v715 = vadd.f32 %v644, %v712
      %v716 = vtanh.pop %v715
      %s717 = scalar_lea.vmem [#allocation2], 40
      %v718 = vld [vmem:[%s717] sm:$0xff]
      %719 = vmatprep.subr.mxu0 0.0
      %720 = vmatpush1.msra.mxu0 %v347
      %721 = vmatprep.subr.mxu0 0.0
      %722 = vmatpush1.msra.mxu0 %v346
      %723 = vmatprep.subr.mxu0 0.0
      %724 = vmatpush1.msra.mxu0 %v345
      %725 = vmatprep.subr.mxu0 0.0
      %726 = vmatpush1.msra.mxu0 %v344
      %727 = vmatprep.subr.mxu0 0.0
      %728 = vmatpush1.msra.mxu0 %v343
      %729 = vmatprep.subr.mxu0 0.0
      %730 = vmatpush1.msra.mxu0 %v342
      %731 = vmatprep.subr.mxu0 0.0
      %732 = vmatpush1.msra.mxu0 %v341
      %733 = vmatprep.subr.mxu0 0.0
      %734 = vmatpush1.msra.mxu0 %v340
      %735 = vmatprep.subr.mxu0 0.0
      %736 = vmatpush1.msra.mxu0 %v339
      %737 = vmatprep.subr.mxu0 0.0
      %738 = vmatpush1.msra.mxu0 %v338
      %739 = vmatprep.subr.mxu0 0.0
      %740 = vmatpush1.msra.mxu0 %v337
      %741 = vmatprep.subr.mxu0 0.0
      %742 = vmatpush1.msra.mxu0 %v336
      %743 = vmatprep.subr.mxu0 0.0
      %744 = vmatpush1.msra.mxu0 %v335
      %745 = vmatprep.subr.mxu0 0.0
      %746 = vmatpush1.msra.mxu0 %v334
      %747 = vmatprep.subr.mxu0 0.0
      %748 = vmatpush1.msra.mxu0 %v333
      %749 = vmatprep.subr.mxu0 0.0
      %750 = vmatpush1.msra.mxu0 %v332
      %751 = vmatprep.subr.mxu0 0.0
      %752 = vmatpush2.msra.mxu0 0.0
      %753 = vmatprep.subr.mxu0 0.0
      %754 = vmatpush2.msra.mxu0 0.0
      %755 = vmatprep.subr.mxu0 0.0
      %756 = vmatpush2.msra.mxu0 0.0
      %757 = vmatprep.subr.mxu0 0.0
      %758 = vmatpush2.msra.mxu0 0.0
      %759 = vmatprep.subr.mxu0 0.0
      %760 = vmatpush2.msra.mxu0 0.0
      %761 = vmatprep.subr.mxu0 0.0
      %762 = vmatpush2.msra.mxu0 0.0
      %763 = vmatprep.subr.mxu0 0.0
      %764 = vmatpush2.msra.mxu0 0.0
      %765 = vmatprep.subr.mxu0 0.0
      %766 = vmatpush2.msra.mxu0 0.0
      %767 = vmatprep.subr.mxu0 0.0
      %768 = vmatpush2.msra.mxu0 0.0
      %769 = vmatprep.subr.mxu0 0.0
      %770 = vmatpush2.msra.mxu0 0.0
      %771 = vmatprep.subr.mxu0 0.0
      %772 = vmatpush2.msra.mxu0 0.0
      %773 = vmatprep.subr.mxu0 0.0
      %774 = vmatpush2.msra.mxu0 0.0
      %775 = vmatprep.subr.mxu0 0.0
      %776 = vmatpush2.msra.mxu0 0.0
      %777 = vmatprep.subr.mxu0 0.0
      %778 = vmatpush2.msra.mxu0 0.0
      %779 = vmatprep.subr.mxu0 0.0
      %780 = vmatpush2.msra.mxu0 0.0
      %781 = vmatprep.subr.mxu0 0.0
      %782 = vmatpush2.msra.mxu0 0.0
      %783 = vmatprep.mubr.f32.mxu0 0.0
      %784 = vmatmul.mubr.f32.gmra.mxu0 %v716
      %v785 = vpop.f32.mrf.mxu0
      %v786 = vadd.f32 0.0, %v785
      %v787 = vpop.f32.mrf.mxu0
      %788 = vdwg.mxu0
      %v789 = vadd.f32 %v718, %v786
      %v790 = vtanh.pop %v789
      %s791 = scalar_lea.vmem [#allocation2], 48
      %v792 = vld [vmem:[%s791] sm:$0xff]
      %793 = vmatprep.subr.mxu0 0.0
      %794 = vmatpush1.msra.mxu0 %v347
      %795 = vmatprep.subr.mxu0 0.0
      %796 = vmatpush1.msra.mxu0 %v346
      %797 = vmatprep.subr.mxu0 0.0
      %798 = vmatpush1.msra.mxu0 %v345
      %799 = vmatprep.subr.mxu0 0.0
      %800 = vmatpush1.msra.mxu0 %v344
      %801 = vmatprep.subr.mxu0 0.0
      %802 = vmatpush1.msra.mxu0 %v343
      %803 = vmatprep.subr.mxu0 0.0
      %804 = vmatpush1.msra.mxu0 %v342
      %805 = vmatprep.subr.mxu0 0.0
      %806 = vmatpush1.msra.mxu0 %v341
      %807 = vmatprep.subr.mxu0 0.0
      %808 = vmatpush1.msra.mxu0 %v340
      %809 = vmatprep.subr.mxu0 0.0
      %810 = vmatpush1.msra.mxu0 %v339
      %811 = vmatprep.subr.mxu0 0.0
      %812 = vmatpush1.msra.mxu0 %v338
      %813 = vmatprep.subr.mxu0 0.0
      %814 = vmatpush1.msra.mxu0 %v337
      %815 = vmatprep.subr.mxu0 0.0
      %816 = vmatpush1.msra.mxu0 %v336
      %817 = vmatprep.subr.mxu0 0.0
      %818 = vmatpush1.msra.mxu0 %v335
      %819 = vmatprep.subr.mxu0 0.0
      %820 = vmatpush1.msra.mxu0 %v334
      %821 = vmatprep.subr.mxu0 0.0
      %822 = vmatpush1.msra.mxu0 %v333
      %823 = vmatprep.subr.mxu0 0.0
      %824 = vmatpush1.msra.mxu0 %v332
      %825 = vmatprep.subr.mxu0 0.0
      %826 = vmatpush2.msra.mxu0 0.0
      %827 = vmatprep.subr.mxu0 0.0
      %828 = vmatpush2.msra.mxu0 0.0
      %829 = vmatprep.subr.mxu0 0.0
      %830 = vmatpush2.msra.mxu0 0.0
      %831 = vmatprep.subr.mxu0 0.0
      %832 = vmatpush2.msra.mxu0 0.0
      %833 = vmatprep.subr.mxu0 0.0
      %834 = vmatpush2.msra.mxu0 0.0
      %835 = vmatprep.subr.mxu0 0.0
      %836 = vmatpush2.msra.mxu0 0.0
      %837 = vmatprep.subr.mxu0 0.0
      %838 = vmatpush2.msra.mxu0 0.0
      %839 = vmatprep.subr.mxu0 0.0
      %840 = vmatpush2.msra.mxu0 0.0
      %841 = vmatprep.subr.mxu0 0.0
      %842 = vmatpush2.msra.mxu0 0.0
      %843 = vmatprep.subr.mxu0 0.0
      %844 = vmatpush2.msra.mxu0 0.0
      %845 = vmatprep.subr.mxu0 0.0
      %846 = vmatpush2.msra.mxu0 0.0
      %847 = vmatprep.subr.mxu0 0.0
      %848 = vmatpush2.msra.mxu0 0.0
      %849 = vmatprep.subr.mxu0 0.0
      %850 = vmatpush2.msra.mxu0 0.0
      %851 = vmatprep.subr.mxu0 0.0
      %852 = vmatpush2.msra.mxu0 0.0
      %853 = vmatprep.subr.mxu0 0.0
      %854 = vmatpush2.msra.mxu0 0.0
      %855 = vmatprep.subr.mxu0 0.0
      %856 = vmatpush2.msra.mxu0 0.0
      %857 = vmatprep.mubr.f32.mxu0 0.0
      %858 = vmatmul.mubr.f32.gmra.mxu0 %v790
      %v859 = vpop.f32.mrf.mxu0
      %v860 = vadd.f32 0.0, %v859
      %v861 = vpop.f32.mrf.mxu0
      %862 = vdwg.mxu0
      %v863 = vadd.f32 %v792, %v860
      %v864 = vtanh.pop %v863
      %s865 = scalar_lea.vmem [#allocation2], 56
      %v866 = vld [vmem:[%s865] sm:$0xff]
      %867 = vmatprep.subr.mxu0 0.0
      %868 = vmatpush1.msra.mxu0 %v347
      %869 = vmatprep.subr.mxu0 0.0
      %870 = vmatpush1.msra.mxu0 %v346
      %871 = vmatprep.subr.mxu0 0.0
      %872 = vmatpush1.msra.mxu0 %v345
      %873 = vmatprep.subr.mxu0 0.0
      %874 = vmatpush1.msra.mxu0 %v344
      %875 = vmatprep.subr.mxu0 0.0
      %876 = vmatpush1.msra.mxu0 %v343
      %877 = vmatprep.subr.mxu0 0.0
      %878 = vmatpush1.msra.mxu0 %v342
      %879 = vmatprep.subr.mxu0 0.0
      %880 = vmatpush1.msra.mxu0 %v341
      %881 = vmatprep.subr.mxu0 0.0
      %882 = vmatpush1.msra.mxu0 %v340
      %883 = vmatprep.subr.mxu0 0.0
      %884 = vmatpush1.msra.mxu0 %v339
      %885 = vmatprep.subr.mxu0 0.0
      %886 = vmatpush1.msra.mxu0 %v338
      %887 = vmatprep.subr.mxu0 0.0
      %888 = vmatpush1.msra.mxu0 %v337
      %889 = vmatprep.subr.mxu0 0.0
      %890 = vmatpush1.msra.mxu0 %v336
      %891 = vmatprep.subr.mxu0 0.0
      %892 = vmatpush1.msra.mxu0 %v335
      %893 = vmatprep.subr.mxu0 0.0
      %894 = vmatpush1.msra.mxu0 %v334
      %895 = vmatprep.subr.mxu0 0.0
      %896 = vmatpush1.msra.mxu0 %v333
      %897 = vmatprep.subr.mxu0 0.0
      %898 = vmatpush1.msra.mxu0 %v332
      %899 = vmatprep.subr.mxu0 0.0
      %900 = vmatpush2.msra.mxu0 0.0
      %901 = vmatprep.subr.mxu0 0.0
      %902 = vmatpush2.msra.mxu0 0.0
      %903 = vmatprep.subr.mxu0 0.0
      %904 = vmatpush2.msra.mxu0 0.0
      %905 = vmatprep.subr.mxu0 0.0
      %906 = vmatpush2.msra.mxu0 0.0
      %907 = vmatprep.subr.mxu0 0.0
      %908 = vmatpush2.msra.mxu0 0.0
      %909 = vmatprep.subr.mxu0 0.0
      %910 = vmatpush2.msra.mxu0 0.0
      %911 = vmatprep.subr.mxu0 0.0
      %912 = vmatpush2.msra.mxu0 0.0
      %913 = vmatprep.subr.mxu0 0.0
      %914 = vmatpush2.msra.mxu0 0.0
      %915 = vmatprep.subr.mxu0 0.0
      %916 = vmatpush2.msra.mxu0 0.0
      %917 = vmatprep.subr.mxu0 0.0
      %918 = vmatpush2.msra.mxu0 0.0
      %919 = vmatprep.subr.mxu0 0.0
      %920 = vmatpush2.msra.mxu0 0.0
      %921 = vmatprep.subr.mxu0 0.0
      %922 = vmatpush2.msra.mxu0 0.0
      %923 = vmatprep.subr.mxu0 0.0
      %924 = vmatpush2.msra.mxu0 0.0
      %925 = vmatprep.subr.mxu0 0.0
      %926 = vmatpush2.msra.mxu0 0.0
      %927 = vmatprep.subr.mxu0 0.0
      %928 = vmatpush2.msra.mxu0 0.0
      %929 = vmatprep.subr.mxu0 0.0
      %930 = vmatpush2.msra.mxu0 0.0
      %931 = vmatprep.mubr.f32.mxu0 0.0
      %932 = vmatmul.mubr.f32.gmra.mxu0 %v864
      %v933 = vpop.f32.mrf.mxu0
      %v934 = vadd.f32 0.0, %v933
      %v935 = vpop.f32.mrf.mxu0
      %936 = vdwg.mxu0
      %v937 = vadd.f32 %v866, %v934
      %v938 = vtanh.pop %v937
      %v939 = vld [vmem:[#allocation12] sm:$0xff]
      %v940 = vld [vmem:[#allocation12 + $0x8] sm:$0xff]
      %v941 = vld [vmem:[#allocation12 + $0x10] sm:$0xff]
      %v942 = vld [vmem:[#allocation12 + $0x18] sm:$0xff]
      %v943 = vld [vmem:[#allocation12 + $0x20] sm:$0xff]
      %v944 = vld [vmem:[#allocation12 + $0x28] sm:$0xff]
      %v945 = vld [vmem:[#allocation12 + $0x30] sm:$0xff]
      %v946 = vld [vmem:[#allocation12 + $0x38] sm:$0xff]
      %v947 = vld [vmem:[#allocation12 + $0x40] sm:$0xff]
      %v948 = vld [vmem:[#allocation12 + $0x48] sm:$0xff]
      %v949 = vld [vmem:[#allocation12 + $0x50] sm:$0xff]
      %v950 = vld [vmem:[#allocation12 + $0x58] sm:$0xff]
      %v951 = vld [vmem:[#allocation12 + $0x60] sm:$0xff]
      %v952 = vld [vmem:[#allocation12 + $0x68] sm:$0xff]
      %v953 = vld [vmem:[#allocation12 + $0x70] sm:$0xff]
      %v954 = vld [vmem:[#allocation12 + $0x78] sm:$0xff]
      %v955 = vld [vmem:[%s6] sm:$0x1]
      %v957 = vlaneseq
      %v958 = vshrl.u32 %v957, 7
      %v959 = vsub.s32 0, %v958
      %v960 = vrot.slane %v955, %v959
      %962 = vmatprep.subr.mxu0 0.0
      %963 = vmatpush1.msra.mxu0 %v954
      %964 = vmatprep.subr.mxu0 0.0
      %965 = vmatpush1.msra.mxu0 %v953
      %966 = vmatprep.subr.mxu0 0.0
      %967 = vmatpush1.msra.mxu0 %v952
      %968 = vmatprep.subr.mxu0 0.0
      %969 = vmatpush1.msra.mxu0 %v951
      %970 = vmatprep.subr.mxu0 0.0
      %971 = vmatpush1.msra.mxu0 %v950
      %972 = vmatprep.subr.mxu0 0.0
      %973 = vmatpush1.msra.mxu0 %v949
      %974 = vmatprep.subr.mxu0 0.0
      %975 = vmatpush1.msra.mxu0 %v948
      %976 = vmatprep.subr.mxu0 0.0
      %977 = vmatpush1.msra.mxu0 %v947
      %978 = vmatprep.subr.mxu0 0.0
      %979 = vmatpush1.msra.mxu0 %v946
      %980 = vmatprep.subr.mxu0 0.0
      %981 = vmatpush1.msra.mxu0 %v945
      %982 = vmatprep.subr.mxu0 0.0
      %983 = vmatpush1.msra.mxu0 %v944
      %984 = vmatprep.subr.mxu0 0.0
      %985 = vmatpush1.msra.mxu0 %v943
      %986 = vmatprep.subr.mxu0 0.0
      %987 = vmatpush1.msra.mxu0 %v942
      %988 = vmatprep.subr.mxu0 0.0
      %989 = vmatpush1.msra.mxu0 %v941
      %990 = vmatprep.subr.mxu0 0.0
      %991 = vmatpush1.msra.mxu0 %v940
      %992 = vmatprep.subr.mxu0 0.0
      %993 = vmatpush1.msra.mxu0 %v939
      %994 = vmatprep.subr.mxu0 0.0
      %995 = vmatpush2.msra.mxu0 0.0
      %996 = vmatprep.subr.mxu0 0.0
      %997 = vmatpush2.msra.mxu0 0.0
      %998 = vmatprep.subr.mxu0 0.0
      %999 = vmatpush2.msra.mxu0 0.0
      %1000 = vmatprep.subr.mxu0 0.0
      %1001 = vmatpush2.msra.mxu0 0.0
      %1002 = vmatprep.subr.mxu0 0.0
      %1003 = vmatpush2.msra.mxu0 0.0
      %1004 = vmatprep.subr.mxu0 0.0
      %1005 = vmatpush2.msra.mxu0 0.0
      %1006 = vmatprep.subr.mxu0 0.0
      %1007 = vmatpush2.msra.mxu0 0.0
      %1008 = vmatprep.subr.mxu0 0.0
      %1009 = vmatpush2.msra.mxu0 0.0
      %1010 = vmatprep.subr.mxu0 0.0
      %1011 = vmatpush2.msra.mxu0 0.0
      %1012 = vmatprep.subr.mxu0 0.0
      %1013 = vmatpush2.msra.mxu0 0.0
      %1014 = vmatprep.subr.mxu0 0.0
      %1015 = vmatpush2.msra.mxu0 0.0
      %1016 = vmatprep.subr.mxu0 0.0
      %1017 = vmatpush2.msra.mxu0 0.0
      %1018 = vmatprep.subr.mxu0 0.0
      %1019 = vmatpush2.msra.mxu0 0.0
      %1020 = vmatprep.subr.mxu0 0.0
      %1021 = vmatpush2.msra.mxu0 0.0
      %1022 = vmatprep.subr.mxu0 0.0
      %1023 = vmatpush2.msra.mxu0 0.0
      %1024 = vmatprep.subr.mxu0 0.0
      %1025 = vmatpush2.msra.mxu0 0.0
      %1026 = vmatprep.mubr.f32.mxu0 0.0
      %1027 = vmatmul.mubr.f32.gmra.mxu0 %v938
      %v1028 = vpop.f32.mrf.mxu0
      %v1029 = vadd.f32 %v960, %v1028
      %v1030 = vpop.f32.mrf.mxu0
      %1031 = vdwg.mxu0
      %v1032 = vtanh.pop %v1029
      %v1033 = vld [vmem:[#allocation7] sm:$0xf]
      %v1034 = vld [vmem:[#allocation7 + $0x4] sm:$0xf]
      %v1035 = vld [vmem:[#allocation7 + $0x8] sm:$0xf]
      %v1036 = vld [vmem:[#allocation7 + $0xc] sm:$0xf]
      %v1037 = vld [vmem:[#allocation7 + $0x10] sm:$0xf]
      %v1038 = vld [vmem:[#allocation7 + $0x14] sm:$0xf]
      %v1039 = vld [vmem:[#allocation7 + $0x18] sm:$0xf]
      %v1040 = vld [vmem:[#allocation7 + $0x1c] sm:$0xf]
      %v1041 = vld [vmem:[#allocation13] sm:$0xf]
      %v1042 = vld [vmem:[#allocation13 + $0x4] sm:$0xf]
      %v1043 = vld [vmem:[#allocation13 + $0x8] sm:$0xf]
      %v1044 = vld [vmem:[#allocation13 + $0xc] sm:$0xf]
      %v1045 = vld [vmem:[#allocation13 + $0x10] sm:$0xf]
      %v1046 = vld [vmem:[#allocation13 + $0x14] sm:$0xf]
      %v1047 = vld [vmem:[#allocation13 + $0x18] sm:$0xf]
      %v1048 = vld [vmem:[#allocation13 + $0x1c] sm:$0xf]
      %v1049 = vld [vmem:[#allocation13 + $0x20] sm:$0xf]
      %v1050 = vld [vmem:[#allocation13 + $0x24] sm:$0xf]
      %v1051 = vld [vmem:[#allocation13 + $0x28] sm:$0xf]
      %v1052 = vld [vmem:[#allocation13 + $0x2c] sm:$0xf]
      %v1053 = vld [vmem:[#allocation13 + $0x30] sm:$0xf]
      %v1054 = vld [vmem:[#allocation13 + $0x34] sm:$0xf]
      %v1055 = vld [vmem:[#allocation13 + $0x38] sm:$0xf]
      %v1056 = vld [vmem:[#allocation13 + $0x3c] sm:$0xf]
      %v1057 = vld [vmem:[%s9] sm:$0x1]
      %v1059 = vlaneseq
      %v1060 = vshrl.u32 %v1059, 7
      %v1061 = vsub.s32 0, %v1060
      %v1062 = vrot.slane %v1057, %v1061
      %v1072 = vunpack.c.l.b16 %v1033
      %v1073 = vunpack.c.l.b16 %v1034
      %v1074 = vunpack.c.l.b16 %v1035
      %v1075 = vunpack.c.l.b16 %v1036
      %v1076 = vunpack.c.l.b16 %v1037
      %v1077 = vunpack.c.l.b16 %v1038
      %v1078 = vunpack.c.l.b16 %v1039
      %v1079 = vunpack.c.l.b16 %v1040
      %v1080 = vpack.c.b16 %v1073, %v1072
      %v1081 = vpack.c.b16 %v1075, %v1074
      %v1082 = vpack.c.b16 %v1077, %v1076
      %v1083 = vpack.c.b16 %v1079, %v1078
      %v1104 = vunpack.c.l.b16 %v1041
      %v1105 = vunpack.c.l.b16 %v1042
      %v1106 = vunpack.c.l.b16 %v1043
      %v1107 = vunpack.c.l.b16 %v1044
      %v1108 = vunpack.c.l.b16 %v1045
      %v1109 = vunpack.c.l.b16 %v1046
      %v1110 = vunpack.c.l.b16 %v1047
      %v1111 = vunpack.c.l.b16 %v1048
      %v1112 = vunpack.c.l.b16 %v1049
      %v1113 = vunpack.c.l.b16 %v1050
      %v1114 = vunpack.c.l.b16 %v1051
      %v1115 = vunpack.c.l.b16 %v1052
      %v1116 = vunpack.c.l.b16 %v1053
      %v1117 = vunpack.c.l.b16 %v1054
      %v1118 = vunpack.c.l.b16 %v1055
      %v1119 = vunpack.c.l.b16 %v1056
      %v1120 = vpack.c.b16 %v1105, %v1104
      %v1121 = vpack.c.b16 %v1107, %v1106
      %v1122 = vpack.c.b16 %v1109, %v1108
      %v1123 = vpack.c.b16 %v1111, %v1110
      %v1124 = vpack.c.b16 %v1113, %v1112
      %v1125 = vpack.c.b16 %v1115, %v1114
      %v1126 = vpack.c.b16 %v1117, %v1116
      %v1127 = vpack.c.b16 %v1119, %v1118
      %1136 = vmatprep.subr.bf16.mxu0 0
      %1137 = vmatpush1.bf16.msra.mxu0 %v1127
      %1138 = vmatprep.subr.bf16.mxu0 0
      %1139 = vmatpush1.bf16.msra.mxu0 %v1126
      %1140 = vmatprep.subr.bf16.mxu0 0
      %1141 = vmatpush1.bf16.msra.mxu0 %v1125
      %1142 = vmatprep.subr.bf16.mxu0 0
      %1143 = vmatpush1.bf16.msra.mxu0 %v1124
      %1144 = vmatprep.subr.bf16.mxu0 0
      %1145 = vmatpush1.bf16.msra.mxu0 %v1123
      %1146 = vmatprep.subr.bf16.mxu0 0
      %1147 = vmatpush1.bf16.msra.mxu0 %v1122
      %1148 = vmatprep.subr.bf16.mxu0 0
      %1149 = vmatpush1.bf16.msra.mxu0 %v1121
      %1150 = vmatprep.subr.bf16.mxu0 0
      %1151 = vmatpush1.bf16.msra.mxu0 %v1120
      %1152 = vmatprep.subr.bf16.mxu0 0
      %1153 = vmatpush2.bf16.msra.mxu0 0
      %1154 = vmatprep.subr.bf16.mxu0 0
      %1155 = vmatpush2.bf16.msra.mxu0 0
      %1156 = vmatprep.subr.bf16.mxu0 0
      %1157 = vmatpush2.bf16.msra.mxu0 0
      %1158 = vmatprep.subr.bf16.mxu0 0
      %1159 = vmatpush2.bf16.msra.mxu0 0
      %1160 = vmatprep.subr.bf16.mxu0 0
      %1161 = vmatpush2.bf16.msra.mxu0 0
      %1162 = vmatprep.subr.bf16.mxu0 0
      %1163 = vmatpush2.bf16.msra.mxu0 0
      %1164 = vmatprep.subr.bf16.mxu0 0
      %1165 = vmatpush2.bf16.msra.mxu0 0
      %1166 = vmatprep.subr.bf16.mxu0 0
      %1167 = vmatpush2.bf16.msra.mxu0 0
      %1168 = vmatprep.mubr.bf16.mxu0 0
      %1169 = vmatmul.mubr.bf16.gmra.mxu0 %v1080
      %v1170 = vpop.f32.mrf.mxu0
      %v1171 = vadd.f32 %v1062, %v1170
      %v1172 = vpop.f32.mrf.mxu0
      %v1173 = vpop.f32.mrf.mxu0
      %v1174 = vadd.f32 %v1062, %v1173
      %v1175 = vpop.f32.mrf.mxu0
      %1176 = vmatprep.mubr.bf16.mxu0 0
      %1177 = vmatmul.mubr.bf16.gmra.mxu0 %v1081
      %v1178 = vpop.f32.mrf.mxu0
      %v1179 = vadd.f32 %v1062, %v1178
      %v1180 = vpop.f32.mrf.mxu0
      %v1181 = vpop.f32.mrf.mxu0
      %v1182 = vadd.f32 %v1062, %v1181
      %v1183 = vpop.f32.mrf.mxu0
      %1184 = vmatprep.mubr.bf16.mxu0 0
      %1185 = vmatmul.mubr.bf16.gmra.mxu0 %v1082
      %v1186 = vpop.f32.mrf.mxu0
      %v1187 = vadd.f32 %v1062, %v1186
      %v1188 = vpop.f32.mrf.mxu0
      %v1189 = vpop.f32.mrf.mxu0
      %v1190 = vadd.f32 %v1062, %v1189
      %v1191 = vpop.f32.mrf.mxu0
      %1192 = vmatprep.mubr.bf16.mxu0 0
      %1193 = vmatmul.mubr.bf16.gmra.mxu0 %v1083
      %v1194 = vpop.f32.mrf.mxu0
      %v1195 = vadd.f32 %v1062, %v1194
      %v1196 = vpop.f32.mrf.mxu0
      %v1197 = vpop.f32.mrf.mxu0
      %v1198 = vadd.f32 %v1062, %v1197
      %v1199 = vpop.f32.mrf.mxu0
      %1200 = vdwg.mxu0
      %1201 = vst [vmem:[#allocation2] sm:$0xff] %v1171
      %1202 = vst [vmem:[#allocation2 + $0x8] sm:$0xff] %v1174
      %1203 = vst [vmem:[#allocation2 + $0x10] sm:$0xff] %v1179
      %1204 = vst [vmem:[#allocation2 + $0x18] sm:$0xff] %v1182
      %1205 = vst [vmem:[#allocation2 + $0x20] sm:$0xff] %v1187
      %1206 = vst [vmem:[#allocation2 + $0x28] sm:$0xff] %v1190
      %1207 = vst [vmem:[#allocation2 + $0x30] sm:$0xff] %v1195
      %1208 = vst [vmem:[#allocation2 + $0x38] sm:$0xff] %v1198
      %v1209 = vld [vmem:[#allocation15] sm:$0xff]
      %v1210 = vld [vmem:[#allocation15 + $0x8] sm:$0xff]
      %v1211 = vld [vmem:[#allocation15 + $0x10] sm:$0xff]
      %v1212 = vld [vmem:[#allocation15 + $0x18] sm:$0xff]
      %v1213 = vld [vmem:[#allocation15 + $0x20] sm:$0xff]
      %v1214 = vld [vmem:[#allocation15 + $0x28] sm:$0xff]
      %v1215 = vld [vmem:[#allocation15 + $0x30] sm:$0xff]
      %v1216 = vld [vmem:[#allocation15 + $0x38] sm:$0xff]
      %v1217 = vld [vmem:[#allocation15 + $0x40] sm:$0xff]
      %v1218 = vld [vmem:[#allocation15 + $0x48] sm:$0xff]
      %v1219 = vld [vmem:[#allocation15 + $0x50] sm:$0xff]
      %v1220 = vld [vmem:[#allocation15 + $0x58] sm:$0xff]
      %v1221 = vld [vmem:[#allocation15 + $0x60] sm:$0xff]
      %v1222 = vld [vmem:[#allocation15 + $0x68] sm:$0xff]
      %v1223 = vld [vmem:[#allocation15 + $0x70] sm:$0xff]
      %v1224 = vld [vmem:[#allocation15 + $0x78] sm:$0xff]
      %v1225 = vld [vmem:[#allocation2] sm:$0xff]
      %1226 = vmatprep.subr.mxu0 0.0
      %1227 = vmatpush1.msra.mxu0 %v1224
      %1228 = vmatprep.subr.mxu0 0.0
      %1229 = vmatpush1.msra.mxu0 %v1223
      %1230 = vmatprep.subr.mxu0 0.0
      %1231 = vmatpush1.msra.mxu0 %v1222
      %1232 = vmatprep.subr.mxu0 0.0
      %1233 = vmatpush1.msra.mxu0 %v1221
      %1234 = vmatprep.subr.mxu0 0.0
      %1235 = vmatpush1.msra.mxu0 %v1220
      %1236 = vmatprep.subr.mxu0 0.0
      %1237 = vmatpush1.msra.mxu0 %v1219
      %1238 = vmatprep.subr.mxu0 0.0
      %1239 = vmatpush1.msra.mxu0 %v1218
      %1240 = vmatprep.subr.mxu0 0.0
      %1241 = vmatpush1.msra.mxu0 %v1217
      %1242 = vmatprep.subr.mxu0 0.0
      %1243 = vmatpush1.msra.mxu0 %v1216
      %1244 = vmatprep.subr.mxu0 0.0
      %1245 = vmatpush1.msra.mxu0 %v1215
      %1246 = vmatprep.subr.mxu0 0.0
      %1247 = vmatpush1.msra.mxu0 %v1214
      %1248 = vmatprep.subr.mxu0 0.0
      %1249 = vmatpush1.msra.mxu0 %v1213
      %1250 = vmatprep.subr.mxu0 0.0
      %1251 = vmatpush1.msra.mxu0 %v1212
      %1252 = vmatprep.subr.mxu0 0.0
      %1253 = vmatpush1.msra.mxu0 %v1211
      %1254 = vmatprep.subr.mxu0 0.0
      %1255 = vmatpush1.msra.mxu0 %v1210
      %1256 = vmatprep.subr.mxu0 0.0
      %1257 = vmatpush1.msra.mxu0 %v1209
      %1258 = vmatprep.subr.mxu0 0.0
      %1259 = vmatpush2.msra.mxu0 0.0
      %1260 = vmatprep.subr.mxu0 0.0
      %1261 = vmatpush2.msra.mxu0 0.0
      %1262 = vmatprep.subr.mxu0 0.0
      %1263 = vmatpush2.msra.mxu0 0.0
      %1264 = vmatprep.subr.mxu0 0.0
      %1265 = vmatpush2.msra.mxu0 0.0
      %1266 = vmatprep.subr.mxu0 0.0
      %1267 = vmatpush2.msra.mxu0 0.0
      %1268 = vmatprep.subr.mxu0 0.0
      %1269 = vmatpush2.msra.mxu0 0.0
      %1270 = vmatprep.subr.mxu0 0.0
      %1271 = vmatpush2.msra.mxu0 0.0
      %1272 = vmatprep.subr.mxu0 0.0
      %1273 = vmatpush2.msra.mxu0 0.0
      %1274 = vmatprep.subr.mxu0 0.0
      %1275 = vmatpush2.msra.mxu0 0.0
      %1276 = vmatprep.subr.mxu0 0.0
      %1277 = vmatpush2.msra.mxu0 0.0
      %1278 = vmatprep.subr.mxu0 0.0
      %1279 = vmatpush2.msra.mxu0 0.0
      %1280 = vmatprep.subr.mxu0 0.0
      %1281 = vmatpush2.msra.mxu0 0.0
      %1282 = vmatprep.subr.mxu0 0.0
      %1283 = vmatpush2.msra.mxu0 0.0
      %1284 = vmatprep.subr.mxu0 0.0
      %1285 = vmatpush2.msra.mxu0 0.0
      %1286 = vmatprep.subr.mxu0 0.0
      %1287 = vmatpush2.msra.mxu0 0.0
      %1288 = vmatprep.subr.mxu0 0.0
      %1289 = vmatpush2.msra.mxu0 0.0
      %1290 = vmatprep.mubr.f32.mxu0 0.0
      %1291 = vmatmul.mubr.f32.gmra.mxu0 %v1032
      %v1292 = vpop.f32.mrf.mxu0
      %v1293 = vadd.f32 0.0, %v1292
      %v1294 = vpop.f32.mrf.mxu0
      %1295 = vdwg.mxu0
      %v1296 = vadd.f32 %v1225, %v1293
      %v1297 = vtanh.pop %v1296
      %1298 = vst [vmem:[#allocation2] sm:$0xff] %v1297
      %v1299 = vld [vmem:[%s421] sm:$0xff]
      %1300 = vmatprep.subr.mxu0 0.0
      %1301 = vmatpush1.msra.mxu0 %v1224
      %1302 = vmatprep.subr.mxu0 0.0
      %1303 = vmatpush1.msra.mxu0 %v1223
      %1304 = vmatprep.subr.mxu0 0.0
      %1305 = vmatpush1.msra.mxu0 %v1222
      %1306 = vmatprep.subr.mxu0 0.0
      %1307 = vmatpush1.msra.mxu0 %v1221
      %1308 = vmatprep.subr.mxu0 0.0
      %1309 = vmatpush1.msra.mxu0 %v1220
      %1310 = vmatprep.subr.mxu0 0.0
      %1311 = vmatpush1.msra.mxu0 %v1219
      %1312 = vmatprep.subr.mxu0 0.0
      %1313 = vmatpush1.msra.mxu0 %v1218
      %1314 = vmatprep.subr.mxu0 0.0
      %1315 = vmatpush1.msra.mxu0 %v1217
      %1316 = vmatprep.subr.mxu0 0.0
      %1317 = vmatpush1.msra.mxu0 %v1216
      %1318 = vmatprep.subr.mxu0 0.0
      %1319 = vmatpush1.msra.mxu0 %v1215
      %1320 = vmatprep.subr.mxu0 0.0
      %1321 = vmatpush1.msra.mxu0 %v1214
      %1322 = vmatprep.subr.mxu0 0.0
      %1323 = vmatpush1.msra.mxu0 %v1213
      %1324 = vmatprep.subr.mxu0 0.0
      %1325 = vmatpush1.msra.mxu0 %v1212
      %1326 = vmatprep.subr.mxu0 0.0
      %1327 = vmatpush1.msra.mxu0 %v1211
      %1328 = vmatprep.subr.mxu0 0.0
      %1329 = vmatpush1.msra.mxu0 %v1210
      %1330 = vmatprep.subr.mxu0 0.0
      %1331 = vmatpush1.msra.mxu0 %v1209
      %1332 = vmatprep.subr.mxu0 0.0
      %1333 = vmatpush2.msra.mxu0 0.0
      %1334 = vmatprep.subr.mxu0 0.0
      %1335 = vmatpush2.msra.mxu0 0.0
      %1336 = vmatprep.subr.mxu0 0.0
      %1337 = vmatpush2.msra.mxu0 0.0
      %1338 = vmatprep.subr.mxu0 0.0
      %1339 = vmatpush2.msra.mxu0 0.0
      %1340 = vmatprep.subr.mxu0 0.0
      %1341 = vmatpush2.msra.mxu0 0.0
      %1342 = vmatprep.subr.mxu0 0.0
      %1343 = vmatpush2.msra.mxu0 0.0
      %1344 = vmatprep.subr.mxu0 0.0
      %1345 = vmatpush2.msra.mxu0 0.0
      %1346 = vmatprep.subr.mxu0 0.0
      %1347 = vmatpush2.msra.mxu0 0.0
      %1348 = vmatprep.subr.mxu0 0.0
      %1349 = vmatpush2.msra.mxu0 0.0
      %1350 = vmatprep.subr.mxu0 0.0
      %1351 = vmatpush2.msra.mxu0 0.0
      %1352 = vmatprep.subr.mxu0 0.0
      %1353 = vmatpush2.msra.mxu0 0.0
      %1354 = vmatprep.subr.mxu0 0.0
      %1355 = vmatpush2.msra.mxu0 0.0
      %1356 = vmatprep.subr.mxu0 0.0
      %1357 = vmatpush2.msra.mxu0 0.0
      %1358 = vmatprep.subr.mxu0 0.0
      %1359 = vmatpush2.msra.mxu0 0.0
      %1360 = vmatprep.subr.mxu0 0.0
      %1361 = vmatpush2.msra.mxu0 0.0
      %1362 = vmatprep.subr.mxu0 0.0
      %1363 = vmatpush2.msra.mxu0 0.0
      %1364 = vmatprep.mubr.f32.mxu0 0.0
      %1365 = vmatmul.mubr.f32.gmra.mxu0 %v1297
      %v1366 = vpop.f32.mrf.mxu0
      %v1367 = vadd.f32 0.0, %v1366
      %v1368 = vpop.f32.mrf.mxu0
      %1369 = vdwg.mxu0
      %v1370 = vadd.f32 %v1299, %v1367
      %v1371 = vtanh.pop %v1370
      %1372 = vst [vmem:[%s421] sm:$0xff] %v1371
      %v1373 = vld [vmem:[%s495] sm:$0xff]
      %1374 = vmatprep.subr.mxu0 0.0
      %1375 = vmatpush1.msra.mxu0 %v1224
      %1376 = vmatprep.subr.mxu0 0.0
      %1377 = vmatpush1.msra.mxu0 %v1223
      %1378 = vmatprep.subr.mxu0 0.0
      %1379 = vmatpush1.msra.mxu0 %v1222
      %1380 = vmatprep.subr.mxu0 0.0
      %1381 = vmatpush1.msra.mxu0 %v1221
      %1382 = vmatprep.subr.mxu0 0.0
      %1383 = vmatpush1.msra.mxu0 %v1220
      %1384 = vmatprep.subr.mxu0 0.0
      %1385 = vmatpush1.msra.mxu0 %v1219
      %1386 = vmatprep.subr.mxu0 0.0
      %1387 = vmatpush1.msra.mxu0 %v1218
      %1388 = vmatprep.subr.mxu0 0.0
      %1389 = vmatpush1.msra.mxu0 %v1217
      %1390 = vmatprep.subr.mxu0 0.0
      %1391 = vmatpush1.msra.mxu0 %v1216
      %1392 = vmatprep.subr.mxu0 0.0
      %1393 = vmatpush1.msra.mxu0 %v1215
      %1394 = vmatprep.subr.mxu0 0.0
      %1395 = vmatpush1.msra.mxu0 %v1214
      %1396 = vmatprep.subr.mxu0 0.0
      %1397 = vmatpush1.msra.mxu0 %v1213
      %1398 = vmatprep.subr.mxu0 0.0
      %1399 = vmatpush1.msra.mxu0 %v1212
      %1400 = vmatprep.subr.mxu0 0.0
      %1401 = vmatpush1.msra.mxu0 %v1211
      %1402 = vmatprep.subr.mxu0 0.0
      %1403 = vmatpush1.msra.mxu0 %v1210
      %1404 = vmatprep.subr.mxu0 0.0
      %1405 = vmatpush1.msra.mxu0 %v1209
      %1406 = vmatprep.subr.mxu0 0.0
      %1407 = vmatpush2.msra.mxu0 0.0
      %1408 = vmatprep.subr.mxu0 0.0
      %1409 = vmatpush2.msra.mxu0 0.0
      %1410 = vmatprep.subr.mxu0 0.0
      %1411 = vmatpush2.msra.mxu0 0.0
      %1412 = vmatprep.subr.mxu0 0.0
      %1413 = vmatpush2.msra.mxu0 0.0
      %1414 = vmatprep.subr.mxu0 0.0
      %1415 = vmatpush2.msra.mxu0 0.0
      %1416 = vmatprep.subr.mxu0 0.0
      %1417 = vmatpush2.msra.mxu0 0.0
      %1418 = vmatprep.subr.mxu0 0.0
      %1419 = vmatpush2.msra.mxu0 0.0
      %1420 = vmatprep.subr.mxu0 0.0
      %1421 = vmatpush2.msra.mxu0 0.0
      %1422 = vmatprep.subr.mxu0 0.0
      %1423 = vmatpush2.msra.mxu0 0.0
      %1424 = vmatprep.subr.mxu0 0.0
      %1425 = vmatpush2.msra.mxu0 0.0
      %1426 = vmatprep.subr.mxu0 0.0
      %1427 = vmatpush2.msra.mxu0 0.0
      %1428 = vmatprep.subr.mxu0 0.0
      %1429 = vmatpush2.msra.mxu0 0.0
      %1430 = vmatprep.subr.mxu0 0.0
      %1431 = vmatpush2.msra.mxu0 0.0
      %1432 = vmatprep.subr.mxu0 0.0
      %1433 = vmatpush2.msra.mxu0 0.0
      %1434 = vmatprep.subr.mxu0 0.0
      %1435 = vmatpush2.msra.mxu0 0.0
      %1436 = vmatprep.subr.mxu0 0.0
      %1437 = vmatpush2.msra.mxu0 0.0
      %1438 = vmatprep.mubr.f32.mxu0 0.0
      %1439 = vmatmul.mubr.f32.gmra.mxu0 %v1371
      %v1440 = vpop.f32.mrf.mxu0
      %v1441 = vadd.f32 0.0, %v1440
      %v1442 = vpop.f32.mrf.mxu0
      %1443 = vdwg.mxu0
      %v1444 = vadd.f32 %v1373, %v1441
      %v1445 = vtanh.pop %v1444
      %1446 = vst [vmem:[%s495] sm:$0xff] %v1445
      %v1447 = vld [vmem:[%s569] sm:$0xff]
      %1448 = vmatprep.subr.mxu0 0.0
      %1449 = vmatpush1.msra.mxu0 %v1224
      %1450 = vmatprep.subr.mxu0 0.0
      %1451 = vmatpush1.msra.mxu0 %v1223
      %1452 = vmatprep.subr.mxu0 0.0
      %1453 = vmatpush1.msra.mxu0 %v1222
      %1454 = vmatprep.subr.mxu0 0.0
      %1455 = vmatpush1.msra.mxu0 %v1221
      %1456 = vmatprep.subr.mxu0 0.0
      %1457 = vmatpush1.msra.mxu0 %v1220
      %1458 = vmatprep.subr.mxu0 0.0
      %1459 = vmatpush1.msra.mxu0 %v1219
      %1460 = vmatprep.subr.mxu0 0.0
      %1461 = vmatpush1.msra.mxu0 %v1218
      %1462 = vmatprep.subr.mxu0 0.0
      %1463 = vmatpush1.msra.mxu0 %v1217
      %1464 = vmatprep.subr.mxu0 0.0
      %1465 = vmatpush1.msra.mxu0 %v1216
      %1466 = vmatprep.subr.mxu0 0.0
      %1467 = vmatpush1.msra.mxu0 %v1215
      %1468 = vmatprep.subr.mxu0 0.0
      %1469 = vmatpush1.msra.mxu0 %v1214
      %1470 = vmatprep.subr.mxu0 0.0
      %1471 = vmatpush1.msra.mxu0 %v1213
      %1472 = vmatprep.subr.mxu0 0.0
      %1473 = vmatpush1.msra.mxu0 %v1212
      %1474 = vmatprep.subr.mxu0 0.0
      %1475 = vmatpush1.msra.mxu0 %v1211
      %1476 = vmatprep.subr.mxu0 0.0
      %1477 = vmatpush1.msra.mxu0 %v1210
      %1478 = vmatprep.subr.mxu0 0.0
      %1479 = vmatpush1.msra.mxu0 %v1209
      %1480 = vmatprep.subr.mxu0 0.0
      %1481 = vmatpush2.msra.mxu0 0.0
      %1482 = vmatprep.subr.mxu0 0.0
      %1483 = vmatpush2.msra.mxu0 0.0
      %1484 = vmatprep.subr.mxu0 0.0
      %1485 = vmatpush2.msra.mxu0 0.0
      %1486 = vmatprep.subr.mxu0 0.0
      %1487 = vmatpush2.msra.mxu0 0.0
      %1488 = vmatprep.subr.mxu0 0.0
      %1489 = vmatpush2.msra.mxu0 0.0
      %1490 = vmatprep.subr.mxu0 0.0
      %1491 = vmatpush2.msra.mxu0 0.0
      %1492 = vmatprep.subr.mxu0 0.0
      %1493 = vmatpush2.msra.mxu0 0.0
      %1494 = vmatprep.subr.mxu0 0.0
      %1495 = vmatpush2.msra.mxu0 0.0
      %1496 = vmatprep.subr.mxu0 0.0
      %1497 = vmatpush2.msra.mxu0 0.0
      %1498 = vmatprep.subr.mxu0 0.0
      %1499 = vmatpush2.msra.mxu0 0.0
      %1500 = vmatprep.subr.mxu0 0.0
      %1501 = vmatpush2.msra.mxu0 0.0
      %1502 = vmatprep.subr.mxu0 0.0
      %1503 = vmatpush2.msra.mxu0 0.0
      %1504 = vmatprep.subr.mxu0 0.0
      %1505 = vmatpush2.msra.mxu0 0.0
      %1506 = vmatprep.subr.mxu0 0.0
      %1507 = vmatpush2.msra.mxu0 0.0
      %1508 = vmatprep.subr.mxu0 0.0
      %1509 = vmatpush2.msra.mxu0 0.0
      %1510 = vmatprep.subr.mxu0 0.0
      %1511 = vmatpush2.msra.mxu0 0.0
      %1512 = vmatprep.mubr.f32.mxu0 0.0
      %1513 = vmatmul.mubr.f32.gmra.mxu0 %v1445
      %v1514 = vpop.f32.mrf.mxu0
      %v1515 = vadd.f32 0.0, %v1514
      %v1516 = vpop.f32.mrf.mxu0
      %1517 = vdwg.mxu0
      %v1518 = vadd.f32 %v1447, %v1515
      %v1519 = vtanh.pop %v1518
      %1520 = vst [vmem:[%s569] sm:$0xff] %v1519
      %v1521 = vld [vmem:[%s643] sm:$0xff]
      %1522 = vmatprep.subr.mxu0 0.0
      %1523 = vmatpush1.msra.mxu0 %v1224
      %1524 = vmatprep.subr.mxu0 0.0
      %1525 = vmatpush1.msra.mxu0 %v1223
      %1526 = vmatprep.subr.mxu0 0.0
      %1527 = vmatpush1.msra.mxu0 %v1222
      %1528 = vmatprep.subr.mxu0 0.0
      %1529 = vmatpush1.msra.mxu0 %v1221
      %1530 = vmatprep.subr.mxu0 0.0
      %1531 = vmatpush1.msra.mxu0 %v1220
      %1532 = vmatprep.subr.mxu0 0.0
      %1533 = vmatpush1.msra.mxu0 %v1219
      %1534 = vmatprep.subr.mxu0 0.0
      %1535 = vmatpush1.msra.mxu0 %v1218
      %1536 = vmatprep.subr.mxu0 0.0
      %1537 = vmatpush1.msra.mxu0 %v1217
      %1538 = vmatprep.subr.mxu0 0.0
      %1539 = vmatpush1.msra.mxu0 %v1216
      %1540 = vmatprep.subr.mxu0 0.0
      %1541 = vmatpush1.msra.mxu0 %v1215
      %1542 = vmatprep.subr.mxu0 0.0
      %1543 = vmatpush1.msra.mxu0 %v1214
      %1544 = vmatprep.subr.mxu0 0.0
      %1545 = vmatpush1.msra.mxu0 %v1213
      %1546 = vmatprep.subr.mxu0 0.0
      %1547 = vmatpush1.msra.mxu0 %v1212
      %1548 = vmatprep.subr.mxu0 0.0
      %1549 = vmatpush1.msra.mxu0 %v1211
      %1550 = vmatprep.subr.mxu0 0.0
      %1551 = vmatpush1.msra.mxu0 %v1210
      %1552 = vmatprep.subr.mxu0 0.0
      %1553 = vmatpush1.msra.mxu0 %v1209
      %1554 = vmatprep.subr.mxu0 0.0
      %1555 = vmatpush2.msra.mxu0 0.0
      %1556 = vmatprep.subr.mxu0 0.0
      %1557 = vmatpush2.msra.mxu0 0.0
      %1558 = vmatprep.subr.mxu0 0.0
      %1559 = vmatpush2.msra.mxu0 0.0
      %1560 = vmatprep.subr.mxu0 0.0
      %1561 = vmatpush2.msra.mxu0 0.0
      %1562 = vmatprep.subr.mxu0 0.0
      %1563 = vmatpush2.msra.mxu0 0.0
      %1564 = vmatprep.subr.mxu0 0.0
      %1565 = vmatpush2.msra.mxu0 0.0
      %1566 = vmatprep.subr.mxu0 0.0
      %1567 = vmatpush2.msra.mxu0 0.0
      %1568 = vmatprep.subr.mxu0 0.0
      %1569 = vmatpush2.msra.mxu0 0.0
      %1570 = vmatprep.subr.mxu0 0.0
      %1571 = vmatpush2.msra.mxu0 0.0
      %1572 = vmatprep.subr.mxu0 0.0
      %1573 = vmatpush2.msra.mxu0 0.0
      %1574 = vmatprep.subr.mxu0 0.0
      %1575 = vmatpush2.msra.mxu0 0.0
      %1576 = vmatprep.subr.mxu0 0.0
      %1577 = vmatpush2.msra.mxu0 0.0
      %1578 = vmatprep.subr.mxu0 0.0
      %1579 = vmatpush2.msra.mxu0 0.0
      %1580 = vmatprep.subr.mxu0 0.0
      %1581 = vmatpush2.msra.mxu0 0.0
      %1582 = vmatprep.subr.mxu0 0.0
      %1583 = vmatpush2.msra.mxu0 0.0
      %1584 = vmatprep.subr.mxu0 0.0
      %1585 = vmatpush2.msra.mxu0 0.0
      %1586 = vmatprep.mubr.f32.mxu0 0.0
      %1587 = vmatmul.mubr.f32.gmra.mxu0 %v1519
      %v1588 = vpop.f32.mrf.mxu0
      %v1589 = vadd.f32 0.0, %v1588
      %v1590 = vpop.f32.mrf.mxu0
      %1591 = vdwg.mxu0
      %v1592 = vadd.f32 %v1521, %v1589
      %v1593 = vtanh.pop %v1592
      %1594 = vst [vmem:[%s643] sm:$0xff] %v1593
      %v1595 = vld [vmem:[%s717] sm:$0xff]
      %1596 = vmatprep.subr.mxu0 0.0
      %1597 = vmatpush1.msra.mxu0 %v1224
      %1598 = vmatprep.subr.mxu0 0.0
      %1599 = vmatpush1.msra.mxu0 %v1223
      %1600 = vmatprep.subr.mxu0 0.0
      %1601 = vmatpush1.msra.mxu0 %v1222
      %1602 = vmatprep.subr.mxu0 0.0
      %1603 = vmatpush1.msra.mxu0 %v1221
      %1604 = vmatprep.subr.mxu0 0.0
      %1605 = vmatpush1.msra.mxu0 %v1220
      %1606 = vmatprep.subr.mxu0 0.0
      %1607 = vmatpush1.msra.mxu0 %v1219
      %1608 = vmatprep.subr.mxu0 0.0
      %1609 = vmatpush1.msra.mxu0 %v1218
      %1610 = vmatprep.subr.mxu0 0.0
      %1611 = vmatpush1.msra.mxu0 %v1217
      %1612 = vmatprep.subr.mxu0 0.0
      %1613 = vmatpush1.msra.mxu0 %v1216
      %1614 = vmatprep.subr.mxu0 0.0
      %1615 = vmatpush1.msra.mxu0 %v1215
      %1616 = vmatprep.subr.mxu0 0.0
      %1617 = vmatpush1.msra.mxu0 %v1214
      %1618 = vmatprep.subr.mxu0 0.0
      %1619 = vmatpush1.msra.mxu0 %v1213
      %1620 = vmatprep.subr.mxu0 0.0
      %1621 = vmatpush1.msra.mxu0 %v1212
      %1622 = vmatprep.subr.mxu0 0.0
      %1623 = vmatpush1.msra.mxu0 %v1211
      %1624 = vmatprep.subr.mxu0 0.0
      %1625 = vmatpush1.msra.mxu0 %v1210
      %1626 = vmatprep.subr.mxu0 0.0
      %1627 = vmatpush1.msra.mxu0 %v1209
      %1628 = vmatprep.subr.mxu0 0.0
      %1629 = vmatpush2.msra.mxu0 0.0
      %1630 = vmatprep.subr.mxu0 0.0
      %1631 = vmatpush2.msra.mxu0 0.0
      %1632 = vmatprep.subr.mxu0 0.0
      %1633 = vmatpush2.msra.mxu0 0.0
      %1634 = vmatprep.subr.mxu0 0.0
      %1635 = vmatpush2.msra.mxu0 0.0
      %1636 = vmatprep.subr.mxu0 0.0
      %1637 = vmatpush2.msra.mxu0 0.0
      %1638 = vmatprep.subr.mxu0 0.0
      %1639 = vmatpush2.msra.mxu0 0.0
      %1640 = vmatprep.subr.mxu0 0.0
      %1641 = vmatpush2.msra.mxu0 0.0
      %1642 = vmatprep.subr.mxu0 0.0
      %1643 = vmatpush2.msra.mxu0 0.0
      %1644 = vmatprep.subr.mxu0 0.0
      %1645 = vmatpush2.msra.mxu0 0.0
      %1646 = vmatprep.subr.mxu0 0.0
      %1647 = vmatpush2.msra.mxu0 0.0
      %1648 = vmatprep.subr.mxu0 0.0
      %1649 = vmatpush2.msra.mxu0 0.0
      %1650 = vmatprep.subr.mxu0 0.0
      %1651 = vmatpush2.msra.mxu0 0.0
      %1652 = vmatprep.subr.mxu0 0.0
      %1653 = vmatpush2.msra.mxu0 0.0
      %1654 = vmatprep.subr.mxu0 0.0
      %1655 = vmatpush2.msra.mxu0 0.0
      %1656 = vmatprep.subr.mxu0 0.0
      %1657 = vmatpush2.msra.mxu0 0.0
      %1658 = vmatprep.subr.mxu0 0.0
      %1659 = vmatpush2.msra.mxu0 0.0
      %1660 = vmatprep.mubr.f32.mxu0 0.0
      %1661 = vmatmul.mubr.f32.gmra.mxu0 %v1593
      %v1662 = vpop.f32.mrf.mxu0
      %v1663 = vadd.f32 0.0, %v1662
      %v1664 = vpop.f32.mrf.mxu0
      %1665 = vdwg.mxu0
      %v1666 = vadd.f32 %v1595, %v1663
      %v1667 = vtanh.pop %v1666
      %1668 = vst [vmem:[%s717] sm:$0xff] %v1667
      %v1669 = vld [vmem:[%s791] sm:$0xff]
      %1670 = vmatprep.subr.mxu0 0.0
      %1671 = vmatpush1.msra.mxu0 %v1224
      %1672 = vmatprep.subr.mxu0 0.0
      %1673 = vmatpush1.msra.mxu0 %v1223
      %1674 = vmatprep.subr.mxu0 0.0
      %1675 = vmatpush1.msra.mxu0 %v1222
      %1676 = vmatprep.subr.mxu0 0.0
      %1677 = vmatpush1.msra.mxu0 %v1221
      %1678 = vmatprep.subr.mxu0 0.0
      %1679 = vmatpush1.msra.mxu0 %v1220
      %1680 = vmatprep.subr.mxu0 0.0
      %1681 = vmatpush1.msra.mxu0 %v1219
      %1682 = vmatprep.subr.mxu0 0.0
      %1683 = vmatpush1.msra.mxu0 %v1218
      %1684 = vmatprep.subr.mxu0 0.0
      %1685 = vmatpush1.msra.mxu0 %v1217
      %1686 = vmatprep.subr.mxu0 0.0
      %1687 = vmatpush1.msra.mxu0 %v1216
      %1688 = vmatprep.subr.mxu0 0.0
      %1689 = vmatpush1.msra.mxu0 %v1215
      %1690 = vmatprep.subr.mxu0 0.0
      %1691 = vmatpush1.msra.mxu0 %v1214
      %1692 = vmatprep.subr.mxu0 0.0
      %1693 = vmatpush1.msra.mxu0 %v1213
      %1694 = vmatprep.subr.mxu0 0.0
      %1695 = vmatpush1.msra.mxu0 %v1212
      %1696 = vmatprep.subr.mxu0 0.0
      %1697 = vmatpush1.msra.mxu0 %v1211
      %1698 = vmatprep.subr.mxu0 0.0
      %1699 = vmatpush1.msra.mxu0 %v1210
      %1700 = vmatprep.subr.mxu0 0.0
      %1701 = vmatpush1.msra.mxu0 %v1209
      %1702 = vmatprep.subr.mxu0 0.0
      %1703 = vmatpush2.msra.mxu0 0.0
      %1704 = vmatprep.subr.mxu0 0.0
      %1705 = vmatpush2.msra.mxu0 0.0
      %1706 = vmatprep.subr.mxu0 0.0
      %1707 = vmatpush2.msra.mxu0 0.0
      %1708 = vmatprep.subr.mxu0 0.0
      %1709 = vmatpush2.msra.mxu0 0.0
      %1710 = vmatprep.subr.mxu0 0.0
      %1711 = vmatpush2.msra.mxu0 0.0
      %1712 = vmatprep.subr.mxu0 0.0
      %1713 = vmatpush2.msra.mxu0 0.0
      %1714 = vmatprep.subr.mxu0 0.0
      %1715 = vmatpush2.msra.mxu0 0.0
      %1716 = vmatprep.subr.mxu0 0.0
      %1717 = vmatpush2.msra.mxu0 0.0
      %1718 = vmatprep.subr.mxu0 0.0
      %1719 = vmatpush2.msra.mxu0 0.0
      %1720 = vmatprep.subr.mxu0 0.0
      %1721 = vmatpush2.msra.mxu0 0.0
      %1722 = vmatprep.subr.mxu0 0.0
      %1723 = vmatpush2.msra.mxu0 0.0
      %1724 = vmatprep.subr.mxu0 0.0
      %1725 = vmatpush2.msra.mxu0 0.0
      %1726 = vmatprep.subr.mxu0 0.0
      %1727 = vmatpush2.msra.mxu0 0.0
      %1728 = vmatprep.subr.mxu0 0.0
      %1729 = vmatpush2.msra.mxu0 0.0
      %1730 = vmatprep.subr.mxu0 0.0
      %1731 = vmatpush2.msra.mxu0 0.0
      %1732 = vmatprep.subr.mxu0 0.0
      %1733 = vmatpush2.msra.mxu0 0.0
      %1734 = vmatprep.mubr.f32.mxu0 0.0
      %1735 = vmatmul.mubr.f32.gmra.mxu0 %v1667
      %v1736 = vpop.f32.mrf.mxu0
      %v1737 = vadd.f32 0.0, %v1736
      %v1738 = vpop.f32.mrf.mxu0
      %1739 = vdwg.mxu0
      %v1740 = vadd.f32 %v1669, %v1737
      %v1741 = vtanh.pop %v1740
      %1742 = vst [vmem:[%s791] sm:$0xff] %v1741
      %v1743 = vld [vmem:[%s865] sm:$0xff]
      %1744 = vmatprep.subr.mxu0 0.0
      %1745 = vmatpush1.msra.mxu0 %v1224
      %1746 = vmatprep.subr.mxu0 0.0
      %1747 = vmatpush1.msra.mxu0 %v1223
      %1748 = vmatprep.subr.mxu0 0.0
      %1749 = vmatpush1.msra.mxu0 %v1222
      %1750 = vmatprep.subr.mxu0 0.0
      %1751 = vmatpush1.msra.mxu0 %v1221
      %1752 = vmatprep.subr.mxu0 0.0
      %1753 = vmatpush1.msra.mxu0 %v1220
      %1754 = vmatprep.subr.mxu0 0.0
      %1755 = vmatpush1.msra.mxu0 %v1219
      %1756 = vmatprep.subr.mxu0 0.0
      %1757 = vmatpush1.msra.mxu0 %v1218
      %1758 = vmatprep.subr.mxu0 0.0
      %1759 = vmatpush1.msra.mxu0 %v1217
      %1760 = vmatprep.subr.mxu0 0.0
      %1761 = vmatpush1.msra.mxu0 %v1216
      %1762 = vmatprep.subr.mxu0 0.0
      %1763 = vmatpush1.msra.mxu0 %v1215
      %1764 = vmatprep.subr.mxu0 0.0
      %1765 = vmatpush1.msra.mxu0 %v1214
      %1766 = vmatprep.subr.mxu0 0.0
      %1767 = vmatpush1.msra.mxu0 %v1213
      %1768 = vmatprep.subr.mxu0 0.0
      %1769 = vmatpush1.msra.mxu0 %v1212
      %1770 = vmatprep.subr.mxu0 0.0
      %1771 = vmatpush1.msra.mxu0 %v1211
      %1772 = vmatprep.subr.mxu0 0.0
      %1773 = vmatpush1.msra.mxu0 %v1210
      %1774 = vmatprep.subr.mxu0 0.0
      %1775 = vmatpush1.msra.mxu0 %v1209
      %1776 = vmatprep.subr.mxu0 0.0
      %1777 = vmatpush2.msra.mxu0 0.0
      %1778 = vmatprep.subr.mxu0 0.0
      %1779 = vmatpush2.msra.mxu0 0.0
      %1780 = vmatprep.subr.mxu0 0.0
      %1781 = vmatpush2.msra.mxu0 0.0
      %1782 = vmatprep.subr.mxu0 0.0
      %1783 = vmatpush2.msra.mxu0 0.0
      %1784 = vmatprep.subr.mxu0 0.0
      %1785 = vmatpush2.msra.mxu0 0.0
      %1786 = vmatprep.subr.mxu0 0.0
      %1787 = vmatpush2.msra.mxu0 0.0
      %1788 = vmatprep.subr.mxu0 0.0
      %1789 = vmatpush2.msra.mxu0 0.0
      %1790 = vmatprep.subr.mxu0 0.0
      %1791 = vmatpush2.msra.mxu0 0.0
      %1792 = vmatprep.subr.mxu0 0.0
      %1793 = vmatpush2.msra.mxu0 0.0
      %1794 = vmatprep.subr.mxu0 0.0
      %1795 = vmatpush2.msra.mxu0 0.0
      %1796 = vmatprep.subr.mxu0 0.0
      %1797 = vmatpush2.msra.mxu0 0.0
      %1798 = vmatprep.subr.mxu0 0.0
      %1799 = vmatpush2.msra.mxu0 0.0
      %1800 = vmatprep.subr.mxu0 0.0
      %1801 = vmatpush2.msra.mxu0 0.0
      %1802 = vmatprep.subr.mxu0 0.0
      %1803 = vmatpush2.msra.mxu0 0.0
      %1804 = vmatprep.subr.mxu0 0.0
      %1805 = vmatpush2.msra.mxu0 0.0
      %1806 = vmatprep.subr.mxu0 0.0
      %1807 = vmatpush2.msra.mxu0 0.0
      %1808 = vmatprep.mubr.f32.mxu0 0.0
      %1809 = vmatmul.mubr.f32.gmra.mxu0 %v1741
      %v1810 = vpop.f32.mrf.mxu0
      %v1811 = vadd.f32 0.0, %v1810
      %v1812 = vpop.f32.mrf.mxu0
      %1813 = vdwg.mxu0
      %v1814 = vadd.f32 %v1743, %v1811
      %v1815 = vtanh.pop %v1814
      %1816 = vst [vmem:[%s865] sm:$0xff] %v1815
      %v1817 = vld [vmem:[#allocation2] sm:$0xff]
      %v1818 = vld [vmem:[#allocation2 + $0x8] sm:$0xff]
      %v1819 = vld [vmem:[#allocation2 + $0x10] sm:$0xff]
      %v1820 = vld [vmem:[#allocation2 + $0x18] sm:$0xff]
      %v1821 = vld [vmem:[#allocation2 + $0x20] sm:$0xff]
      %v1822 = vld [vmem:[#allocation2 + $0x28] sm:$0xff]
      %v1823 = vld [vmem:[#allocation2 + $0x30] sm:$0xff]
      %v1824 = vld [vmem:[#allocation2 + $0x38] sm:$0xff]
      %v1825 = vpack.c.bf16 %v1818, %v1817
      %v1826 = vpack.c.bf16 %v1820, %v1819
      %v1827 = vpack.c.bf16 %v1822, %v1821
      %v1828 = vpack.c.bf16 %v1824, %v1823
      %v1833 = vunpack.c.l.b16 %v1825
      %v1834 = vunpack.c.h.b16 %v1825
      %v1835 = vunpack.c.l.b16 %v1826
      %v1836 = vunpack.c.h.b16 %v1826
      %v1837 = vunpack.c.l.b16 %v1827
      %v1838 = vunpack.c.h.b16 %v1827
      %v1839 = vunpack.c.l.b16 %v1828
      %v1840 = vunpack.c.h.b16 %v1828
      %v1841 = vpack.c.b16 %v1833, %v1833
      %v1842 = vpack.c.b16 %v1834, %v1834
      %v1843 = vpack.c.b16 %v1835, %v1835
      %v1844 = vpack.c.b16 %v1836, %v1836
      %v1845 = vpack.c.b16 %v1837, %v1837
      %v1846 = vpack.c.b16 %v1838, %v1838
      %v1847 = vpack.c.b16 %v1839, %v1839
      %v1848 = vpack.c.b16 %v1840, %v1840
      %1857 = vst [vmem:[#allocation3] sm:$0xf] %v1841
      %1858 = vst [vmem:[#allocation3 + $0x4] sm:$0xf] %v1842
      %1859 = vst [vmem:[#allocation3 + $0x8] sm:$0xf] %v1843
      %1860 = vst [vmem:[#allocation3 + $0xc] sm:$0xf] %v1844
      %1861 = vst [vmem:[#allocation3 + $0x10] sm:$0xf] %v1845
      %1862 = vst [vmem:[#allocation3 + $0x14] sm:$0xf] %v1846
      %1863 = vst [vmem:[#allocation3 + $0x18] sm:$0xf] %v1847
      %1864 = vst [vmem:[#allocation3 + $0x1c] sm:$0xf] %v1848
    $region85: #{tpu_custom_call.1} parent=1 // pred_fallthru
      _
    %v1865 = vld [vmem:[#allocation3] sm:$0xf]
    %v1866 = vld [vmem:[#allocation3 + $0x4] sm:$0xf]
    %v1867 = vld [vmem:[#allocation3 + $0x8] sm:$0xf]
    %v1868 = vld [vmem:[#allocation3 + $0xc] sm:$0xf]
    %v1869 = vld [vmem:[#allocation3 + $0x10] sm:$0xf]
    %v1870 = vld [vmem:[#allocation3 + $0x14] sm:$0xf]
    %v1871 = vld [vmem:[#allocation3 + $0x18] sm:$0xf]
    %v1872 = vld [vmem:[#allocation3 + $0x1c] sm:$0xf]
    %v1873 = vld [vmem:[#allocation16] sm:$0xf]
    %v1874 = vld [vmem:[#allocation16 + $0x4] sm:$0xf]
    %v1875 = vld [vmem:[#allocation16 + $0x8] sm:$0xf]
    %v1876 = vld [vmem:[#allocation16 + $0xc] sm:$0xf]
    %v1877 = vld [vmem:[#allocation16 + $0x10] sm:$0xf]
    %v1878 = vld [vmem:[#allocation16 + $0x14] sm:$0xf]
    %v1879 = vld [vmem:[#allocation16 + $0x18] sm:$0xf]
    %v1880 = vld [vmem:[#allocation16 + $0x1c] sm:$0xf]
    %v1881 = vld [vmem:[#allocation16 + $0x20] sm:$0xf]
    %v1882 = vld [vmem:[#allocation16 + $0x24] sm:$0xf]
    %v1883 = vld [vmem:[#allocation16 + $0x28] sm:$0xf]
    %v1884 = vld [vmem:[#allocation16 + $0x2c] sm:$0xf]
    %v1885 = vld [vmem:[#allocation16 + $0x30] sm:$0xf]
    %v1886 = vld [vmem:[#allocation16 + $0x34] sm:$0xf]
    %v1887 = vld [vmem:[#allocation16 + $0x38] sm:$0xf]
    %v1888 = vld [vmem:[#allocation16 + $0x3c] sm:$0xf]
    %v1889 = vld [vmem:[%s11] sm:$0x1]
    %v1891 = vlaneseq
    %v1892 = vshrl.u32 %v1891, 7
    %v1893 = vsub.s32 0, %v1892
    %v1894 = vrot.slane %v1889, %v1893
    %v1904 = vunpack.c.l.b16 %v1865
    %v1905 = vunpack.c.l.b16 %v1866
    %v1906 = vunpack.c.l.b16 %v1867
    %v1907 = vunpack.c.l.b16 %v1868
    %v1908 = vunpack.c.l.b16 %v1869
    %v1909 = vunpack.c.l.b16 %v1870
    %v1910 = vunpack.c.l.b16 %v1871
    %v1911 = vunpack.c.l.b16 %v1872
    %v1912 = vpack.c.b16 %v1905, %v1904
    %v1913 = vpack.c.b16 %v1907, %v1906
    %v1914 = vpack.c.b16 %v1909, %v1908
    %v1915 = vpack.c.b16 %v1911, %v1910
    %v1936 = vunpack.c.l.b16 %v1873
    %v1937 = vunpack.c.l.b16 %v1874
    %v1938 = vunpack.c.l.b16 %v1875
    %v1939 = vunpack.c.l.b16 %v1876
    %v1940 = vunpack.c.l.b16 %v1877
    %v1941 = vunpack.c.l.b16 %v1878
    %v1942 = vunpack.c.l.b16 %v1879
    %v1943 = vunpack.c.l.b16 %v1880
    %v1944 = vunpack.c.l.b16 %v1881
    %v1945 = vunpack.c.l.b16 %v1882
    %v1946 = vunpack.c.l.b16 %v1883
    %v1947 = vunpack.c.l.b16 %v1884
    %v1948 = vunpack.c.l.b16 %v1885
    %v1949 = vunpack.c.l.b16 %v1886
    %v1950 = vunpack.c.l.b16 %v1887
    %v1951 = vunpack.c.l.b16 %v1888
    %v1952 = vpack.c.b16 %v1937, %v1936
    %v1953 = vpack.c.b16 %v1939, %v1938
    %v1954 = vpack.c.b16 %v1941, %v1940
    %v1955 = vpack.c.b16 %v1943, %v1942
    %v1956 = vpack.c.b16 %v1945, %v1944
    %v1957 = vpack.c.b16 %v1947, %v1946
    %v1958 = vpack.c.b16 %v1949, %v1948
    %v1959 = vpack.c.b16 %v1951, %v1950
    %1968 = vmatprep.subr.bf16.mxu0 0
    %1969 = vmatpush1.bf16.msra.mxu0 %v1959
    %1970 = vmatprep.subr.bf16.mxu0 0
    %1971 = vmatpush1.bf16.msra.mxu0 %v1958
    %1972 = vmatprep.subr.bf16.mxu0 0
    %1973 = vmatpush1.bf16.msra.mxu0 %v1957
    %1974 = vmatprep.subr.bf16.mxu0 0
    %1975 = vmatpush1.bf16.msra.mxu0 %v1956
    %1976 = vmatprep.subr.bf16.mxu0 0
    %1977 = vmatpush1.bf16.msra.mxu0 %v1955
    %1978 = vmatprep.subr.bf16.mxu0 0
    %1979 = vmatpush1.bf16.msra.mxu0 %v1954
    %1980 = vmatprep.subr.bf16.mxu0 0
    %1981 = vmatpush1.bf16.msra.mxu0 %v1953
    %1982 = vmatprep.subr.bf16.mxu0 0
    %1983 = vmatpush1.bf16.msra.mxu0 %v1952
    %1984 = vmatprep.subr.bf16.mxu0 0
    %1985 = vmatpush2.bf16.msra.mxu0 0
    %1986 = vmatprep.subr.bf16.mxu0 0
    %1987 = vmatpush2.bf16.msra.mxu0 0
    %1988 = vmatprep.subr.bf16.mxu0 0
    %1989 = vmatpush2.bf16.msra.mxu0 0
    %1990 = vmatprep.subr.bf16.mxu0 0
    %1991 = vmatpush2.bf16.msra.mxu0 0
    %1992 = vmatprep.subr.bf16.mxu0 0
    %1993 = vmatpush2.bf16.msra.mxu0 0
    %1994 = vmatprep.subr.bf16.mxu0 0
    %1995 = vmatpush2.bf16.msra.mxu0 0
    %1996 = vmatprep.subr.bf16.mxu0 0
    %1997 = vmatpush2.bf16.msra.mxu0 0
    %1998 = vmatprep.subr.bf16.mxu0 0
    %1999 = vmatpush2.bf16.msra.mxu0 0
    %2000 = vmatprep.mubr.bf16.mxu0 0
    %2001 = vmatmul.mubr.bf16.gmra.mxu0 %v1912
    %v2002 = vpop.f32.mrf.mxu0
    %v2003 = vadd.f32 %v1894, %v2002
    %v2004 = vpop.f32.mrf.mxu0
    %v2005 = vpop.f32.mrf.mxu0
    %v2006 = vadd.f32 %v1894, %v2005
    %v2007 = vpop.f32.mrf.mxu0
    %2008 = vmatprep.mubr.bf16.mxu0 0
    %2009 = vmatmul.mubr.bf16.gmra.mxu0 %v1913
    %v2010 = vpop.f32.mrf.mxu0
    %v2011 = vadd.f32 %v1894, %v2010
    %v2012 = vpop.f32.mrf.mxu0
    %v2013 = vpop.f32.mrf.mxu0
    %v2014 = vadd.f32 %v1894, %v2013
    %v2015 = vpop.f32.mrf.mxu0
    %2016 = vmatprep.mubr.bf16.mxu0 0
    %2017 = vmatmul.mubr.bf16.gmra.mxu0 %v1914
    %v2018 = vpop.f32.mrf.mxu0
    %v2019 = vadd.f32 %v1894, %v2018
    %v2020 = vpop.f32.mrf.mxu0
    %v2021 = vpop.f32.mrf.mxu0
    %v2022 = vadd.f32 %v1894, %v2021
    %v2023 = vpop.f32.mrf.mxu0
    %2024 = vmatprep.mubr.bf16.mxu0 0
    %2025 = vmatmul.mubr.bf16.gmra.mxu0 %v1915
    %v2026 = vpop.f32.mrf.mxu0
    %v2027 = vadd.f32 %v1894, %v2026
    %v2028 = vpop.f32.mrf.mxu0
    %v2029 = vpop.f32.mrf.mxu0
    %v2030 = vadd.f32 %v1894, %v2029
    %v2031 = vpop.f32.mrf.mxu0
    %2032 = vdwg.mxu0
    %2033 = vst [vmem:[#allocation18] sm:$0xff] %v2003
    %2034 = vst [vmem:[#allocation18 + $0x8] sm:$0xff] %v2006
    %2035 = vst [vmem:[#allocation18 + $0x10] sm:$0xff] %v2011
    %2036 = vst [vmem:[#allocation18 + $0x18] sm:$0xff] %v2014
    %2037 = vst [vmem:[#allocation18 + $0x20] sm:$0xff] %v2019
    %2038 = vst [vmem:[#allocation18 + $0x28] sm:$0xff] %v2022
    %2039 = vst [vmem:[#allocation18 + $0x30] sm:$0xff] %v2027
    %2040 = vst [vmem:[#allocation18 + $0x38] sm:$0xff] %v2030
    // Predicated region
    $region86: #{tpu_custom_call.1} parent=1 // pred_check
      _
    $region87: #{tpu_custom_call.1} parent=1 // pred_check_branch
      %2042 = sbr.rel (0) target = $region89
    $region88: #{tpu_custom_call.1} parent=1 // pred_region
      %s2044 = ssub.s32 1024, 1024
      %2045 = vsyncadd [#allocation6], %s2044
      %s2046 = sshll.u32 [#allocation18], 4
      %s2047 = int_to_ptr.vmem [resolvable:$true] %s2046
      %2052 = dma.vmem_to_hbm [thread:$0]  %s2047, 1024, %s12, [#allocation6], 128, 128, 8
    $region89: #{tpu_custom_call.1} parent=1 // pred_fallthru
      _
    // Predicated region
    $region90: #{tpu_custom_call.1} parent=1 // pred_check
      _
    $region91: #{tpu_custom_call.1} parent=1 // pred_check_branch
      %2054 = sbr.rel (0) target = $region93
    $region92: #{tpu_custom_call.1} parent=1 // pred_region
      %2055 = dma.done [#allocation6], 1024
    $region93: #{tpu_custom_call.1} parent=1 // pred_fallthru
      _
    %2056 = vsyncpa [#allocation5], 1
    %2057 = vsyncpa [#allocation8], 1
    %2058 = vsyncpa [#allocation11], 1
    %2059 = vsyncpa [#allocation14], 1
    %2060 = vsyncpa [#allocation17], 1
    %2061 = vsyncpa [#allocation6], 1

</llo_original>
